<compile_context>
chip_gen: v7x
topology: tpu7x:2x2x1
jax: 0.10.0
libtpu: 0.0.40
codegen_flags: <defaults>
</compile_context>

<pallas_src>
import jax
import jax.numpy as jnp
from jax.experimental import pallas as pl
from jax.experimental.pallas import tpu as pltpu

# ---------------- config ----------------
SHOT_EMB_DIM = 16
N_FOURIER = 4
FEAT_IN = 7                                 # 'inject' in feat_in_mlp
GEMB_DIM = 6 * N_FOURIER                    # 24
IN_DIM = SHOT_EMB_DIM + FEAT_IN + GEMB_DIM  # 47
HIDDEN = 32
OUT_DIMS = (3, 4)
OUT_DIM = sum(OUT_DIMS)                     # 7
OUT_PAD = 128                               # lane-dense output width
POS_COEFF = 0.1
ROT_COEFF = 0.05

N_POINTS = 256                              # small demo size


def _round_up(x, m):
    return (x + m - 1) // m * m


# ---------------- Pallas kernel ----------------
def posrot_mlp_kernel(mean_ref, quat_ref, gemb_ref, semb_ref,
                      w1m_ref, w1q_ref, w1g_ref, w1s_ref, b1_ref,
                      w2_ref, b2_ref, w3_ref, out_ref):
    cdt = w2_ref.dtype  # compute dtype (f32 or bf16); accumulation is f32

    # Layer 1 with fused input concat: w1 is pre-split into four row blocks
    # matching (mean, quats, gembedding, sembedding); sum the partial matmuls.
    h = jnp.dot(mean_ref[...], w1m_ref[...], preferred_element_type=jnp.float32)
    h = h + jnp.dot(quat_ref[...], w1q_ref[...], preferred_element_type=jnp.float32)
    h = h + jnp.dot(gemb_ref[...], w1g_ref[...], preferred_element_type=jnp.float32)
    h = h + jnp.dot(semb_ref[...], w1s_ref[...], preferred_element_type=jnp.float32)
    h = jnp.maximum(h + b1_ref[...], 0.0).astype(cdt)

    # Layer 2
    h = jnp.dot(h, w2_ref[...], preferred_element_type=jnp.float32) + b2_ref[...]
    h = jnp.maximum(h, 0.0).astype(cdt)

    # Layer 3: pos/rot scales already folded into w3; w3 zero-padded to 128
    # output lanes so the store is lane-dense (unmasked vst).
    out_ref[...] = jnp.dot(h, w3_ref[...],
                           preferred_element_type=jnp.float32).astype(out_ref.dtype)


# ---------------- wrapper ----------------
def posrot_mlp_forward(gembedding, sembedding, mean, quats, params,
                       *, compute_dtype=jnp.float32):
    """Fused PosRotMLP forward. Returns (pos [N,3], rot [N,4]) in float32."""
    w1, b1, w2, b2, w3 = params
    n = mean.shape[0]
    assert mean.shape == (n, 3) and quats.shape == (n, 4)
    assert gembedding.shape == (n, GEMB_DIM)
    assert sembedding.shape == (n, SHOT_EMB_DIM)

    # Row tile: large tiles for HBM/pipeline efficiency, but keep >=2 grid
    # steps where possible so both v7x TensorCores get a "parallel" slice.
    tm = min(512, _round_up(max(pl.cdiv(n, 2), 8), 8))
    n_pad = _round_up(n, tm)

    def prep(x):
        x = x.astype(compute_dtype)
        if n_pad != n:
            x = jnp.pad(x, ((0, n_pad - n), (0, 0)))
        return x

    mean_p, quat_p = prep(mean), prep(quats)
    gemb_p, semb_p = prep(gembedding), prep(sembedding)

    # Split w1 along its input rows to match the (mean, quats, gemb, semb)
    # concat order used by the PyTorch module.
    w1m = w1[:3].astype(compute_dtype)
    w1q = w1[3:7].astype(compute_dtype)
    w1g = w1[7:7 + GEMB_DIM].astype(compute_dtype)
    w1s = w1[7 + GEMB_DIM:].astype(compute_dtype)

    # Fold per-group output scales into w3 and zero-pad to 128 output columns.
    scale = jnp.concatenate(
        [jnp.full((OUT_DIMS[0],), POS_COEFF, jnp.float32),
         jnp.full((OUT_DIMS[1],), ROT_COEFF, jnp.float32)])[None, :]     # (1, 7)
    w3p = jnp.zeros((HIDDEN, OUT_PAD), jnp.float32).at[:, :OUT_DIM].set(w3 * scale)
    w3p = w3p.astype(compute_dtype)
    w2c = w2.astype(compute_dtype)
    b1f = b1.astype(jnp.float32)
    b2f = b2.astype(jnp.float32)

    def row_spec(d):
        return pl.BlockSpec((tm, d), lambda i: (i, 0))

    def const_spec(shape):
        # Constant block index across the grid -> Pallas keeps the block
        # resident in VMEM (no re-DMA per step).
        return pl.BlockSpec(shape, lambda i: (0, 0))

    out = pl.pallas_call(
        posrot_mlp_kernel,
        out_shape=jax.ShapeDtypeStruct((n_pad, OUT_PAD), jnp.float32),
        grid_spec=pltpu.PrefetchScalarGridSpec(
            num_scalar_prefetch=0,
            grid=(n_pad // tm,),
            in_specs=[
                row_spec(3),                        # mean tile
                row_spec(4),                        # quats tile
                row_spec(GEMB_DIM),                 # gembedding tile
                row_spec(SHOT_EMB_DIM),             # sembedding tile
                const_spec((3, HIDDEN)),            # w1[mean rows]
                const_spec((4, HIDDEN)),            # w1[quat rows]
                const_spec((GEMB_DIM, HIDDEN)),     # w1[gemb rows]
                const_spec((SHOT_EMB_DIM, HIDDEN)), # w1[semb rows]
                const_spec((1, HIDDEN)),            # b1
                const_spec((HIDDEN, HIDDEN)),       # w2
                const_spec((1, HIDDEN)),            # b2
                const_spec((HIDDEN, OUT_PAD)),      # w3 (scaled, lane-padded)
            ],
            out_specs=pl.BlockSpec((tm, OUT_PAD), lambda i: (i, 0)),
        ),
        compiler_params=pltpu.CompilerParams(
            dimension_semantics=("parallel",)),
    )(mean_p, quat_p, gemb_p, semb_p,
      w1m, w1q, w1g, w1s, b1f, w2c, b2f, w3p)

    out = out[:n, :OUT_DIM]                 # drop row padding + lane padding
    return out[:, :OUT_DIMS[0]], out[:, OUT_DIMS[0]:]


# ---------------- params / reference ----------------
def init_params(key):
    """Weights stored transposed ((in, out)) relative to torch's (out, in)."""
    k1, k2, k3, k4, k5 = jax.random.split(key, 5)
    w1 = jax.random.normal(k1, (IN_DIM, HIDDEN), jnp.float32) * 0.1
    b1 = jax.random.normal(k2, (1, HIDDEN), jnp.float32) * 0.01
    w2 = jax.random.normal(k3, (HIDDEN, HIDDEN), jnp.float32) * 0.1
    b2 = jax.random.normal(k4, (1, HIDDEN), jnp.float32) * 0.01
    # Reference __init__ zeroes this weight; non-zero here so the kernel is
    # actually exercised.  Set to zeros to match the literal module init.
    w3 = jax.random.normal(k5, (HIDDEN, OUT_DIM), jnp.float32) * 0.1
    return w1, b1, w2, b2, w3


def reference_forward(gembedding, sembedding, mean, quats, params):
    """Pure-JAX reference of the PyTorch forward."""
    w1, b1, w2, b2, w3 = params
    x = jnp.concatenate([mean, quats, gembedding, sembedding], axis=-1)
    h = jnp.maximum(x @ w1 + b1, 0.0)
    h = jnp.maximum(h @ w2 + b2, 0.0)
    o = h @ w3
    return o[:, :3] * POS_COEFF, o[:, 3:] * ROT_COEFF


if __name__ == "__main__":
    key = jax.random.PRNGKey(0)
    kp, kg, ks, km, kq = jax.random.split(key, 5)

    params = init_params(kp)
    gembedding = jax.random.normal(kg, (N_POINTS, GEMB_DIM), jnp.float32)
    sembedding = jax.random.normal(ks, (N_POINTS, SHOT_EMB_DIM), jnp.float32)
    mean = jax.random.normal(km, (N_POINTS, 3), jnp.float32)
    quats = jax.random.normal(kq, (N_POINTS, 4), jnp.float32)

    pos_ref, rot_ref = reference_forward(gembedding, sembedding, mean, quats,
                                         params)

    # f32 compute path — must match the reference tightly.
    pos, rot = posrot_mlp_forward(gembedding, sembedding, mean, quats, params)
    pos, rot = jax.block_until_ready((pos, rot))
    assert pos.shape == (N_POINTS, 3) and rot.shape == (N_POINTS, 4)
    assert jnp.allclose(pos, pos_ref, atol=1e-5, rtol=1e-5)
    assert jnp.allclose(rot, rot_ref, atol=1e-5, rtol=1e-5)

    # bf16 inputs/weights (f32 accumulation) — halves input HBM traffic on
    # v6e/v7x; checked with loose tolerance against the f32 reference.
    pos_bf, rot_bf = posrot_mlp_forward(gembedding, sembedding, mean, quats,
                                        params, compute_dtype=jnp.bfloat16)
    pos_bf, rot_bf = jax.block_until_ready((pos_bf, rot_bf))
    assert jnp.allclose(pos_bf, pos_ref, atol=2e-2, rtol=1e-1)
    assert jnp.allclose(rot_bf, rot_ref, atol=2e-2, rtol=1e-1)

    print("KERNEL_OK")
</pallas_src>

<mosaic_0001>
module attributes {stable_mosaic.version = 11 : i64} {
  func.func @posrot_mlp_kernel(%arg0: i32, %arg1: memref<128x3xf32, #tpu.memory_space<vmem>>, %arg2: memref<128x4xf32, #tpu.memory_space<vmem>>, %arg3: memref<128x24xf32, #tpu.memory_space<vmem>>, %arg4: memref<128x16xf32, #tpu.memory_space<vmem>>, %arg5: memref<3x32xf32, #tpu.memory_space<vmem>>, %arg6: memref<4x32xf32, #tpu.memory_space<vmem>>, %arg7: memref<24x32xf32, #tpu.memory_space<vmem>>, %arg8: memref<16x32xf32, #tpu.memory_space<vmem>>, %arg9: memref<1x32xf32, #tpu.memory_space<vmem>>, %arg10: memref<32x32xf32, #tpu.memory_space<vmem>>, %arg11: memref<1x32xf32, #tpu.memory_space<vmem>>, %arg12: memref<32x128xf32, #tpu.memory_space<vmem>>, %arg13: memref<128x128xf32, #tpu.memory_space<vmem>>) attributes {dimension_semantics = [#tpu.dimension_semantics<parallel>], iteration_bounds = array<i64: 2>, scalar_prefetch = 0 : i64, scratch_operands = 0 : i64, tpu.core_type = #tpu.core_type<tc>, window_params = [{transform_indices = @transform_0, window_bounds = array<i64: 128, 3>}, {transform_indices = @transform_1, window_bounds = array<i64: 128, 4>}, {transform_indices = @transform_2, window_bounds = array<i64: 128, 24>}, {transform_indices = @transform_3, window_bounds = array<i64: 128, 16>}, {pipeline_mode = #tpu.pipeline_mode<synchronous>, transform_indices = @transform_4, window_bounds = array<i64: 3, 32>}, {pipeline_mode = #tpu.pipeline_mode<synchronous>, transform_indices = @transform_5, window_bounds = array<i64: 4, 32>}, {pipeline_mode = #tpu.pipeline_mode<synchronous>, transform_indices = @transform_6, window_bounds = array<i64: 24, 32>}, {pipeline_mode = #tpu.pipeline_mode<synchronous>, transform_indices = @transform_7, window_bounds = array<i64: 16, 32>}, {pipeline_mode = #tpu.pipeline_mode<synchronous>, transform_indices = @transform_8, window_bounds = array<i64: 1, 32>}, {pipeline_mode = #tpu.pipeline_mode<synchronous>, transform_indices = @transform_9, window_bounds = array<i64: 32, 32>}, {pipeline_mode = #tpu.pipeline_mode<synchronous>, transform_indices = @transform_10, window_bounds = array<i64: 1, 32>}, {pipeline_mode = #tpu.pipeline_mode<synchronous>, transform_indices = @transform_11, window_bounds = array<i64: 32, 128>}, {transform_indices = @transform_12, window_bounds = array<i64: 128, 128>}]} {
    %c0 = arith.constant 0 : index
    %c0_0 = arith.constant 0 : index
    %0 = vector.load %arg1[%c0, %c0_0] : memref<128x3xf32, #tpu.memory_space<vmem>>, vector<128x3xf32>
    %c0_1 = arith.constant 0 : index
    %c0_2 = arith.constant 0 : index
    %1 = vector.load %arg5[%c0_1, %c0_2] : memref<3x32xf32, #tpu.memory_space<vmem>>, vector<3x32xf32>
    %cst = arith.constant dense<0.000000e+00> : vector<128x32xf32>
    %2 = tpu.matmul %0, %1, %cst {dimension_numbers = #tpu.dot_dimension_numbers<[1], [0], [0], [1], [0, 0, 1, 1], [], []>} : vector<128x3xf32>, vector<3x32xf32>, vector<128x32xf32> -> vector<128x32xf32>
    %c0_3 = arith.constant 0 : index
    %c0_4 = arith.constant 0 : index
    %3 = vector.load %arg2[%c0_3, %c0_4] : memref<128x4xf32, #tpu.memory_space<vmem>>, vector<128x4xf32>
    %c0_5 = arith.constant 0 : index
    %c0_6 = arith.constant 0 : index
    %4 = vector.load %arg6[%c0_5, %c0_6] : memref<4x32xf32, #tpu.memory_space<vmem>>, vector<4x32xf32>
    %cst_7 = arith.constant dense<0.000000e+00> : vector<128x32xf32>
    %5 = tpu.matmul %3, %4, %cst_7 {dimension_numbers = #tpu.dot_dimension_numbers<[1], [0], [0], [1], [0, 0, 1, 1], [], []>} : vector<128x4xf32>, vector<4x32xf32>, vector<128x32xf32> -> vector<128x32xf32>
    %6 = arith.addf %2, %5 : vector<128x32xf32>
    %c0_8 = arith.constant 0 : index
    %c0_9 = arith.constant 0 : index
    %7 = vector.load %arg3[%c0_8, %c0_9] : memref<128x24xf32, #tpu.memory_space<vmem>>, vector<128x24xf32>
    %c0_10 = arith.constant 0 : index
    %c0_11 = arith.constant 0 : index
    %8 = vector.load %arg7[%c0_10, %c0_11] : memref<24x32xf32, #tpu.memory_space<vmem>>, vector<24x32xf32>
    %cst_12 = arith.constant dense<0.000000e+00> : vector<128x32xf32>
    %9 = tpu.matmul %7, %8, %cst_12 {dimension_numbers = #tpu.dot_dimension_numbers<[1], [0], [0], [1], [0, 0, 1, 1], [], []>} : vector<128x24xf32>, vector<24x32xf32>, vector<128x32xf32> -> vector<128x32xf32>
    %10 = arith.addf %6, %9 : vector<128x32xf32>
    %c0_13 = arith.constant 0 : index
    %c0_14 = arith.constant 0 : index
    %11 = vector.load %arg4[%c0_13, %c0_14] : memref<128x16xf32, #tpu.memory_space<vmem>>, vector<128x16xf32>
    %c0_15 = arith.constant 0 : index
    %c0_16 = arith.constant 0 : index
    %12 = vector.load %arg8[%c0_15, %c0_16] : memref<16x32xf32, #tpu.memory_space<vmem>>, vector<16x32xf32>
    %cst_17 = arith.constant dense<0.000000e+00> : vector<128x32xf32>
    %13 = tpu.matmul %11, %12, %cst_17 {dimension_numbers = #tpu.dot_dimension_numbers<[1], [0], [0], [1], [0, 0, 1, 1], [], []>} : vector<128x16xf32>, vector<16x32xf32>, vector<128x32xf32> -> vector<128x32xf32>
    %14 = arith.addf %10, %13 : vector<128x32xf32>
    %c0_18 = arith.constant 0 : index
    %c0_19 = arith.constant 0 : index
    %15 = vector.load %arg9[%c0_18, %c0_19] : memref<1x32xf32, #tpu.memory_space<vmem>>, vector<1x32xf32>
    %16 = vector.broadcast %15 : vector<1x32xf32> to vector<128x32xf32>
    %17 = arith.addf %14, %16 : vector<128x32xf32>
    %cst_20 = arith.constant 0.000000e+00 : f32
    %18 = vector.broadcast %cst_20 : f32 to vector<128x32xf32>
    %19 = arith.maximumf %17, %18 : vector<128x32xf32>
    %c0_21 = arith.constant 0 : index
    %c0_22 = arith.constant 0 : index
    %20 = vector.load %arg10[%c0_21, %c0_22] : memref<32x32xf32, #tpu.memory_space<vmem>>, vector<32x32xf32>
    %cst_23 = arith.constant dense<0.000000e+00> : vector<128x32xf32>
    %21 = tpu.matmul %19, %20, %cst_23 {dimension_numbers = #tpu.dot_dimension_numbers<[1], [0], [0], [1], [0, 0, 1, 1], [], []>} : vector<128x32xf32>, vector<32x32xf32>, vector<128x32xf32> -> vector<128x32xf32>
    %c0_24 = arith.constant 0 : index
    %c0_25 = arith.constant 0 : index
    %22 = vector.load %arg11[%c0_24, %c0_25] : memref<1x32xf32, #tpu.memory_space<vmem>>, vector<1x32xf32>
    %23 = vector.broadcast %22 : vector<1x32xf32> to vector<128x32xf32>
    %24 = arith.addf %21, %23 : vector<128x32xf32>
    %cst_26 = arith.constant 0.000000e+00 : f32
    %25 = vector.broadcast %cst_26 : f32 to vector<128x32xf32>
    %26 = arith.maximumf %24, %25 : vector<128x32xf32>
    %c0_27 = arith.constant 0 : index
    %c0_28 = arith.constant 0 : index
    %27 = vector.load %arg12[%c0_27, %c0_28] : memref<32x128xf32, #tpu.memory_space<vmem>>, vector<32x128xf32>
    %cst_29 = arith.constant dense<0.000000e+00> : vector<128x128xf32>
    %28 = tpu.matmul %26, %27, %cst_29 {dimension_numbers = #tpu.dot_dimension_numbers<[1], [0], [0], [1], [0, 0, 1, 1], [], []>} : vector<128x32xf32>, vector<32x128xf32>, vector<128x128xf32> -> vector<128x128xf32>
    %c0_30 = arith.constant 0 : index
    %c0_31 = arith.constant 0 : index
    %29 = vector.load %arg13[%c0_30, %c0_31] : memref<128x128xf32, #tpu.memory_space<vmem>>, vector<128x128xf32>
    tpu.vector_store %arg13[%c0_30, %c0_31], %28 {strides = array<i32>} : memref<128x128xf32, #tpu.memory_space<vmem>>, vector<128x128xf32>,
    return
  }
  func.func @transform_0(%arg0: i32) -> (i32, i32) {
    %c0_i32 = arith.constant 0 : i32
    %c0_i32_0 = arith.constant 0 : i32
    return %arg0, %c0_i32 : i32, i32
  }
  func.func @transform_1(%arg0: i32) -> (i32, i32) {
    %c0_i32 = arith.constant 0 : i32
    %c0_i32_0 = arith.constant 0 : i32
    return %arg0, %c0_i32 : i32, i32
  }
  func.func @transform_2(%arg0: i32) -> (i32, i32) {
    %c0_i32 = arith.constant 0 : i32
    %c0_i32_0 = arith.constant 0 : i32
    return %arg0, %c0_i32 : i32, i32
  }
  func.func @transform_3(%arg0: i32) -> (i32, i32) {
    %c0_i32 = arith.constant 0 : i32
    %c0_i32_0 = arith.constant 0 : i32
    return %arg0, %c0_i32 : i32, i32
  }
  func.func @transform_4(%arg0: i32) -> (i32, i32) {
    %c0_i32 = arith.constant 0 : i32
    %c0_i32_0 = arith.constant 0 : i32
    %c0_i32_1 = arith.constant 0 : i32
    return %c0_i32, %c0_i32_0 : i32, i32
  }
  func.func @transform_5(%arg0: i32) -> (i32, i32) {
    %c0_i32 = arith.constant 0 : i32
    %c0_i32_0 = arith.constant 0 : i32
    %c0_i32_1 = arith.constant 0 : i32
    return %c0_i32, %c0_i32_0 : i32, i32
  }
  func.func @transform_6(%arg0: i32) -> (i32, i32) {
    %c0_i32 = arith.constant 0 : i32
    %c0_i32_0 = arith.constant 0 : i32
    %c0_i32_1 = arith.constant 0 : i32
    return %c0_i32, %c0_i32_0 : i32, i32
  }
  func.func @transform_7(%arg0: i32) -> (i32, i32) {
    %c0_i32 = arith.constant 0 : i32
    %c0_i32_0 = arith.constant 0 : i32
    %c0_i32_1 = arith.constant 0 : i32
    return %c0_i32, %c0_i32_0 : i32, i32
  }
  func.func @transform_8(%arg0: i32) -> (i32, i32) {
    %c0_i32 = arith.constant 0 : i32
    %c0_i32_0 = arith.constant 0 : i32
    %c0_i32_1 = arith.constant 0 : i32
    return %c0_i32, %c0_i32_0 : i32, i32
  }
  func.func @transform_9(%arg0: i32) -> (i32, i32) {
    %c0_i32 = arith.constant 0 : i32
    %c0_i32_0 = arith.constant 0 : i32
    %c0_i32_1 = arith.constant 0 : i32
    return %c0_i32, %c0_i32_0 : i32, i32
  }
  func.func @transform_10(%arg0: i32) -> (i32, i32) {
    %c0_i32 = arith.constant 0 : i32
    %c0_i32_0 = arith.constant 0 : i32
    %c0_i32_1 = arith.constant 0 : i32
    return %c0_i32, %c0_i32_0 : i32, i32
  }
  func.func @transform_11(%arg0: i32) -> (i32, i32) {
    %c0_i32 = arith.constant 0 : i32
    %c0_i32_0 = arith.constant 0 : i32
    %c0_i32_1 = arith.constant 0 : i32
    return %c0_i32, %c0_i32_0 : i32, i32
  }
  func.func @transform_12(%arg0: i32) -> (i32, i32) {
    %c0_i32 = arith.constant 0 : i32
    %c0_i32_0 = arith.constant 0 : i32
    return %arg0, %c0_i32 : i32, i32
  }
}

</mosaic_0001>

<llo_original>
// kernel: tpu_custom_call.1
$region0: #{tpu_custom_call.1}
  #allocation0 [shape = 'u32[]', space=smem, size = 0x4, offset = 0x4, fixed_abs, tag = 'smem constant byte address 0x4 - core index']
  #allocation1 [shape = 'u32[144,128]{1,0:T(1,128)}', space=vmem, size = 0x12000, scoped, tag = 'internal scratch']
  %s0 = inlined_call_operand.vmem [shape: f32[256,3], index: 0, kind: input, shape index: {}]
  %s1 = inlined_call_operand.vmem [shape: f32[256,4], index: 1, kind: input, shape index: {}]
  %s2 = inlined_call_operand.vmem [shape: f32[256,24], index: 2, kind: input, shape index: {}]
  %s3 = inlined_call_operand.vmem [shape: f32[256,16], index: 3, kind: input, shape index: {}]
  %s4 = inlined_call_operand.vmem [shape: f32[3,32], index: 4, kind: input, shape index: {}]
  %s5 = inlined_call_operand.vmem [shape: f32[4,32], index: 5, kind: input, shape index: {}]
  %s6 = inlined_call_operand.vmem [shape: f32[24,32], index: 6, kind: input, shape index: {}]
  %s7 = inlined_call_operand.vmem [shape: f32[16,32], index: 7, kind: input, shape index: {}]
  %s8 = inlined_call_operand.vmem [shape: f32[1,32], index: 8, kind: input, shape index: {}]
  %s9 = inlined_call_operand.vmem [shape: f32[32,32], index: 9, kind: input, shape index: {}]
  %s10 = inlined_call_operand.vmem [shape: f32[1,32], index: 10, kind: input, shape index: {}]
  %s11 = inlined_call_operand.vmem [shape: f32[32,128], index: 11, kind: input, shape index: {}]
  %s12 = inlined_call_operand.hbm [shape: f32[256,128], index: 12, kind: output, shape index: {}]
  %s13 = sld [smem:[#allocation0]]
  $region81: #{tpu_custom_call.1} parent=0
    _
  %s15 = ssub.s32 1, %s13
  %s16 = scalar_select 0, %s15, %s13
  $region1: #{tpu_custom_call.1} parent=0
    #allocation2 [shape = 'u8[131072]{0}', space=vmem, size = 0x20000, scoped, tag = 'output window, operand 0']
    #allocation3 [shape = 's32[2]{0}', space=sflag, size = 0x8, scoped, tag = 'scoped memory for tpu_custom_call.1']
    %17 = vsyncpa [#allocation3], 0
    %s18 = scalar_lea.sflag [#allocation3], 1
    %19 = vsyncpa %s18, 0
    loop: start=0, step=1, limit=4
    $region2: #{tpu_custom_call.1} parent=1 // loop_pre_header
      _
    $region3: #{tpu_custom_call.1} parent=1 // loop_header
      %s21 = sphi 0, %s25
      %p22 = scmp.ge.s32.totalorder %s21, 4
      %s31 = sphi 0, %s33
      %s34 = sphi 0, %s31
      %s35 = sphi 0, %s34
      %s51 = sphi 0, %s35
      %s57 = sphi 0, %s59
      %s60 = sphi 0, %s57
      %s61 = sphi 0, %s60
      %s77 = sphi 0, %s61
      %s83 = sphi 0, %s85
      %s86 = sphi 0, %s83
      %s87 = sphi 0, %s86
      %s103 = sphi 0, %s87
      %s109 = sphi 0, %s111
      %s112 = sphi 0, %s109
      %s113 = sphi 0, %s112
      %s129 = sphi 0, %s113
      %s133 = sphi 0, %s133
      %s135 = sphi 0, %s133
      %s136 = sphi 0, %s135
      %s150 = sphi 0, %s136
      %s154 = sphi 0, %s154
      %s156 = sphi 0, %s154
      %s157 = sphi 0, %s156
      %s171 = sphi 0, %s157
      %s175 = sphi 0, %s175
      %s177 = sphi 0, %s175
      %s178 = sphi 0, %s177
      %s192 = sphi 0, %s178
      %s196 = sphi 0, %s196
      %s198 = sphi 0, %s196
      %s199 = sphi 0, %s198
      %s213 = sphi 0, %s199
      %s217 = sphi 0, %s217
      %s219 = sphi 0, %s217
      %s220 = sphi 0, %s219
      %s234 = sphi 0, %s220
      %s238 = sphi 0, %s238
      %s240 = sphi 0, %s238
      %s241 = sphi 0, %s240
      %s255 = sphi 0, %s241
      %s259 = sphi 0, %s259
      %s261 = sphi 0, %s259
      %s262 = sphi 0, %s261
      %s276 = sphi 0, %s262
      %s280 = sphi 0, %s280
      %s282 = sphi 0, %s280
      %s283 = sphi 0, %s282
      %s297 = sphi 0, %s283
      %s303 = sphi 0, %s305
      %s306 = sphi 0, %s303
      %s307 = sphi 0, %s306
      %s323 = sphi 0, %s307
    $region4: #{tpu_custom_call.1} parent=1 // loop_header_branch
      %24 = sbr.rel (%p22) target = $region8
    $region5: #{tpu_custom_call.1} parent=1 // loop_body
      %s26 = ssub.s32 %s21, 1
      %s27 = ssub.s32 %s21, 2
      %s28 = sadd.s32 %s21, 1
      %s29 = ssub.s32 %s21, %s28
      %p30 = scmp.eq.s32.totalorder %s29, 0
      %s32 = sadd.s32 %s31, 1
      %s33 = scalar_select %p30, %s31, %s32
      %p36 = pneg %p30
      %p37 = scmp.eq.s32.totalorder %s21, 1
      %p38 = por %p36, %p37
      %p39 = scmp.ne.s32.totalorder %s31, %s34
      %p40 = scmp.eq.s32.totalorder %s21, 0
      %p41 = por %p39, %p40
      %p42 = scmp.ne.s32.totalorder %s31, %s34
      %p43 = scmp.eq.s32.totalorder %s26, 1
      %p44 = por %p42, %p43
      %p45 = scmp.ne.s32.totalorder %s34, %s35
      %p46 = scmp.eq.s32.totalorder %s26, 0
      %p47 = por %p45, %p46
      %p48 = scmp.ne.s32.totalorder %s34, %s35
      %p49 = scmp.eq.s32.totalorder %s27, 1
      %p50 = por %p48, %p49
      %p52 = scmp.ne.s32.totalorder %s35, %s51
      %p53 = scmp.eq.s32.totalorder %s27, 0
      %p54 = por %p52, %p53
      %s55 = ssub.s32 %s21, %s28
      %p56 = scmp.eq.s32.totalorder %s55, 0
      %s58 = sadd.s32 %s57, 1
      %s59 = scalar_select %p56, %s57, %s58
      %p62 = pneg %p56
      %p63 = scmp.eq.s32.totalorder %s21, 1
      %p64 = por %p62, %p63
      %p65 = scmp.ne.s32.totalorder %s57, %s60
      %p66 = scmp.eq.s32.totalorder %s21, 0
      %p67 = por %p65, %p66
      %p68 = scmp.ne.s32.totalorder %s57, %s60
      %p69 = scmp.eq.s32.totalorder %s26, 1
      %p70 = por %p68, %p69
      %p71 = scmp.ne.s32.totalorder %s60, %s61
      %p72 = scmp.eq.s32.totalorder %s26, 0
      %p73 = por %p71, %p72
      %p74 = scmp.ne.s32.totalorder %s60, %s61
      %p75 = scmp.eq.s32.totalorder %s27, 1
      %p76 = por %p74, %p75
      %p78 = scmp.ne.s32.totalorder %s61, %s77
      %p79 = scmp.eq.s32.totalorder %s27, 0
      %p80 = por %p78, %p79
      %s81 = ssub.s32 %s21, %s28
      %p82 = scmp.eq.s32.totalorder %s81, 0
      %s84 = sadd.s32 %s83, 1
      %s85 = scalar_select %p82, %s83, %s84
      %p88 = pneg %p82
      %p89 = scmp.eq.s32.totalorder %s21, 1
      %p90 = por %p88, %p89
      %p91 = scmp.ne.s32.totalorder %s83, %s86
      %p92 = scmp.eq.s32.totalorder %s21, 0
      %p93 = por %p91, %p92
      %p94 = scmp.ne.s32.totalorder %s83, %s86
      %p95 = scmp.eq.s32.totalorder %s26, 1
      %p96 = por %p94, %p95
      %p97 = scmp.ne.s32.totalorder %s86, %s87
      %p98 = scmp.eq.s32.totalorder %s26, 0
      %p99 = por %p97, %p98
      %p100 = scmp.ne.s32.totalorder %s86, %s87
      %p101 = scmp.eq.s32.totalorder %s27, 1
      %p102 = por %p100, %p101
      %p104 = scmp.ne.s32.totalorder %s87, %s103
      %p105 = scmp.eq.s32.totalorder %s27, 0
      %p106 = por %p104, %p105
      %s107 = ssub.s32 %s21, %s28
      %p108 = scmp.eq.s32.totalorder %s107, 0
      %s110 = sadd.s32 %s109, 1
      %s111 = scalar_select %p108, %s109, %s110
      %p114 = pneg %p108
      %p115 = scmp.eq.s32.totalorder %s21, 1
      %p116 = por %p114, %p115
      %p117 = scmp.ne.s32.totalorder %s109, %s112
      %p118 = scmp.eq.s32.totalorder %s21, 0
      %p119 = por %p117, %p118
      %p120 = scmp.ne.s32.totalorder %s109, %s112
      %p121 = scmp.eq.s32.totalorder %s26, 1
      %p122 = por %p120, %p121
      %p123 = scmp.ne.s32.totalorder %s112, %s113
      %p124 = scmp.eq.s32.totalorder %s26, 0
      %p125 = por %p123, %p124
      %p126 = scmp.ne.s32.totalorder %s112, %s113
      %p127 = scmp.eq.s32.totalorder %s27, 1
      %p128 = por %p126, %p127
      %p130 = scmp.ne.s32.totalorder %s113, %s129
      %p131 = scmp.eq.s32.totalorder %s27, 0
      %p132 = por %p130, %p131
      %s134 = sadd.s32 %s133, 1
      %p137 = scmp.eq.s32.totalorder %s21, 1
      %p138 = scmp.ne.s32.totalorder %s133, %s135
      %p139 = scmp.eq.s32.totalorder %s21, 0
      %p140 = por %p138, %p139
      %p141 = scmp.ne.s32.totalorder %s133, %s135
      %p142 = scmp.eq.s32.totalorder %s26, 1
      %p143 = por %p141, %p142
      %p144 = scmp.ne.s32.totalorder %s135, %s136
      %p145 = scmp.eq.s32.totalorder %s26, 0
      %p146 = por %p144, %p145
      %p147 = scmp.ne.s32.totalorder %s135, %s136
      %p148 = scmp.eq.s32.totalorder %s27, 1
      %p149 = por %p147, %p148
      %p151 = scmp.ne.s32.totalorder %s136, %s150
      %p152 = scmp.eq.s32.totalorder %s27, 0
      %p153 = por %p151, %p152
      %s155 = sadd.s32 %s154, 1
      %p158 = scmp.eq.s32.totalorder %s21, 1
      %p159 = scmp.ne.s32.totalorder %s154, %s156
      %p160 = scmp.eq.s32.totalorder %s21, 0
      %p161 = por %p159, %p160
      %p162 = scmp.ne.s32.totalorder %s154, %s156
      %p163 = scmp.eq.s32.totalorder %s26, 1
      %p164 = por %p162, %p163
      %p165 = scmp.ne.s32.totalorder %s156, %s157
      %p166 = scmp.eq.s32.totalorder %s26, 0
      %p167 = por %p165, %p166
      %p168 = scmp.ne.s32.totalorder %s156, %s157
      %p169 = scmp.eq.s32.totalorder %s27, 1
      %p170 = por %p168, %p169
      %p172 = scmp.ne.s32.totalorder %s157, %s171
      %p173 = scmp.eq.s32.totalorder %s27, 0
      %p174 = por %p172, %p173
      %s176 = sadd.s32 %s175, 1
      %p179 = scmp.eq.s32.totalorder %s21, 1
      %p180 = scmp.ne.s32.totalorder %s175, %s177
      %p181 = scmp.eq.s32.totalorder %s21, 0
      %p182 = por %p180, %p181
      %p183 = scmp.ne.s32.totalorder %s175, %s177
      %p184 = scmp.eq.s32.totalorder %s26, 1
      %p185 = por %p183, %p184
      %p186 = scmp.ne.s32.totalorder %s177, %s178
      %p187 = scmp.eq.s32.totalorder %s26, 0
      %p188 = por %p186, %p187
      %p189 = scmp.ne.s32.totalorder %s177, %s178
      %p190 = scmp.eq.s32.totalorder %s27, 1
      %p191 = por %p189, %p190
      %p193 = scmp.ne.s32.totalorder %s178, %s192
      %p194 = scmp.eq.s32.totalorder %s27, 0
      %p195 = por %p193, %p194
      %s197 = sadd.s32 %s196, 1
      %p200 = scmp.eq.s32.totalorder %s21, 1
      %p201 = scmp.ne.s32.totalorder %s196, %s198
      %p202 = scmp.eq.s32.totalorder %s21, 0
      %p203 = por %p201, %p202
      %p204 = scmp.ne.s32.totalorder %s196, %s198
      %p205 = scmp.eq.s32.totalorder %s26, 1
      %p206 = por %p204, %p205
      %p207 = scmp.ne.s32.totalorder %s198, %s199
      %p208 = scmp.eq.s32.totalorder %s26, 0
      %p209 = por %p207, %p208
      %p210 = scmp.ne.s32.totalorder %s198, %s199
      %p211 = scmp.eq.s32.totalorder %s27, 1
      %p212 = por %p210, %p211
      %p214 = scmp.ne.s32.totalorder %s199, %s213
      %p215 = scmp.eq.s32.totalorder %s27, 0
      %p216 = por %p214, %p215
      %s218 = sadd.s32 %s217, 1
      %p221 = scmp.eq.s32.totalorder %s21, 1
      %p222 = scmp.ne.s32.totalorder %s217, %s219
      %p223 = scmp.eq.s32.totalorder %s21, 0
      %p224 = por %p222, %p223
      %p225 = scmp.ne.s32.totalorder %s217, %s219
      %p226 = scmp.eq.s32.totalorder %s26, 1
      %p227 = por %p225, %p226
      %p228 = scmp.ne.s32.totalorder %s219, %s220
      %p229 = scmp.eq.s32.totalorder %s26, 0
      %p230 = por %p228, %p229
      %p231 = scmp.ne.s32.totalorder %s219, %s220
      %p232 = scmp.eq.s32.totalorder %s27, 1
      %p233 = por %p231, %p232
      %p235 = scmp.ne.s32.totalorder %s220, %s234
      %p236 = scmp.eq.s32.totalorder %s27, 0
      %p237 = por %p235, %p236
      %s239 = sadd.s32 %s238, 1
      %p242 = scmp.eq.s32.totalorder %s21, 1
      %p243 = scmp.ne.s32.totalorder %s238, %s240
      %p244 = scmp.eq.s32.totalorder %s21, 0
      %p245 = por %p243, %p244
      %p246 = scmp.ne.s32.totalorder %s238, %s240
      %p247 = scmp.eq.s32.totalorder %s26, 1
      %p248 = por %p246, %p247
      %p249 = scmp.ne.s32.totalorder %s240, %s241
      %p250 = scmp.eq.s32.totalorder %s26, 0
      %p251 = por %p249, %p250
      %p252 = scmp.ne.s32.totalorder %s240, %s241
      %p253 = scmp.eq.s32.totalorder %s27, 1
      %p254 = por %p252, %p253
      %p256 = scmp.ne.s32.totalorder %s241, %s255
      %p257 = scmp.eq.s32.totalorder %s27, 0
      %p258 = por %p256, %p257
      %s260 = sadd.s32 %s259, 1
      %p263 = scmp.eq.s32.totalorder %s21, 1
      %p264 = scmp.ne.s32.totalorder %s259, %s261
      %p265 = scmp.eq.s32.totalorder %s21, 0
      %p266 = por %p264, %p265
      %p267 = scmp.ne.s32.totalorder %s259, %s261
      %p268 = scmp.eq.s32.totalorder %s26, 1
      %p269 = por %p267, %p268
      %p270 = scmp.ne.s32.totalorder %s261, %s262
      %p271 = scmp.eq.s32.totalorder %s26, 0
      %p272 = por %p270, %p271
      %p273 = scmp.ne.s32.totalorder %s261, %s262
      %p274 = scmp.eq.s32.totalorder %s27, 1
      %p275 = por %p273, %p274
      %p277 = scmp.ne.s32.totalorder %s262, %s276
      %p278 = scmp.eq.s32.totalorder %s27, 0
      %p279 = por %p277, %p278
      %s281 = sadd.s32 %s280, 1
      %p284 = scmp.eq.s32.totalorder %s21, 1
      %p285 = scmp.ne.s32.totalorder %s280, %s282
      %p286 = scmp.eq.s32.totalorder %s21, 0
      %p287 = por %p285, %p286
      %p288 = scmp.ne.s32.totalorder %s280, %s282
      %p289 = scmp.eq.s32.totalorder %s26, 1
      %p290 = por %p288, %p289
      %p291 = scmp.ne.s32.totalorder %s282, %s283
      %p292 = scmp.eq.s32.totalorder %s26, 0
      %p293 = por %p291, %p292
      %p294 = scmp.ne.s32.totalorder %s282, %s283
      %p295 = scmp.eq.s32.totalorder %s27, 1
      %p296 = por %p294, %p295
      %p298 = scmp.ne.s32.totalorder %s283, %s297
      %p299 = scmp.eq.s32.totalorder %s27, 0
      %p300 = por %p298, %p299
      %s301 = ssub.s32 %s21, %s28
      %p302 = scmp.eq.s32.totalorder %s301, 0
      %s304 = sadd.s32 %s303, 1
      %s305 = scalar_select %p302, %s303, %s304
      %p308 = pneg %p302
      %p309 = scmp.eq.s32.totalorder %s21, 1
      %p310 = por %p308, %p309
      %p311 = scmp.ne.s32.totalorder %s303, %s306
      %p312 = scmp.eq.s32.totalorder %s21, 0
      %p313 = por %p311, %p312
      %p314 = scmp.ne.s32.totalorder %s303, %s306
      %p315 = scmp.eq.s32.totalorder %s26, 1
      %p316 = por %p314, %p315
      %p317 = scmp.ne.s32.totalorder %s306, %s307
      %p318 = scmp.eq.s32.totalorder %s26, 0
      %p319 = por %p317, %p318
      %p320 = scmp.ne.s32.totalorder %s306, %s307
      %p321 = scmp.eq.s32.totalorder %s27, 1
      %p322 = por %p320, %p321
      %p324 = scmp.ne.s32.totalorder %s307, %s323
      %p325 = scmp.eq.s32.totalorder %s27, 0
      %p326 = por %p324, %p325
      %p327 = scmp.le.s32.totalorder 1, %s21
      %p328 = scmp.lt.s32.totalorder %s21, 3
      %p329 = pnand %p327, %p328
      %p330 = pneg %p329
      // Predicated region
      $region9: #{tpu_custom_call.1} parent=5 // pred_check
        _
      $region10: #{tpu_custom_call.1} parent=5 // pred_check_branch
        %332 = sbr.rel (%p329) target = $region12
      $region11: #{tpu_custom_call.1} parent=5 // pred_region
        %s333 = ssub.s32 %s21, 1
        // Predicated region
        $region13: #{tpu_custom_call.1} parent=11 // pred_check
          %p334 = pneg %p146
        $region14: #{tpu_custom_call.1} parent=11 // pred_check_branch
          %336 = sbr.rel (%p334) target = $region16
        $region15: #{tpu_custom_call.1} parent=11 // pred_region
          _
        $region16: #{tpu_custom_call.1} parent=11 // pred_fallthru
          _
        // Predicated region
        $region17: #{tpu_custom_call.1} parent=11 // pred_check
          %p337 = pneg %p167
        $region18: #{tpu_custom_call.1} parent=11 // pred_check_branch
          %339 = sbr.rel (%p337) target = $region20
        $region19: #{tpu_custom_call.1} parent=11 // pred_region
          _
        $region20: #{tpu_custom_call.1} parent=11 // pred_fallthru
          _
        // Predicated region
        $region21: #{tpu_custom_call.1} parent=11 // pred_check
          %p340 = pneg %p188
        $region22: #{tpu_custom_call.1} parent=11 // pred_check_branch
          %342 = sbr.rel (%p340) target = $region24
        $region23: #{tpu_custom_call.1} parent=11 // pred_region
          _
        $region24: #{tpu_custom_call.1} parent=11 // pred_fallthru
          _
        // Predicated region
        $region25: #{tpu_custom_call.1} parent=11 // pred_check
          %p343 = pneg %p209
        $region26: #{tpu_custom_call.1} parent=11 // pred_check_branch
          %345 = sbr.rel (%p343) target = $region28
        $region27: #{tpu_custom_call.1} parent=11 // pred_region
          _
        $region28: #{tpu_custom_call.1} parent=11 // pred_fallthru
          _
        // Predicated region
        $region29: #{tpu_custom_call.1} parent=11 // pred_check
          %p346 = pneg %p230
        $region30: #{tpu_custom_call.1} parent=11 // pred_check_branch
          %348 = sbr.rel (%p346) target = $region32
        $region31: #{tpu_custom_call.1} parent=11 // pred_region
          _
        $region32: #{tpu_custom_call.1} parent=11 // pred_fallthru
          _
        // Predicated region
        $region33: #{tpu_custom_call.1} parent=11 // pred_check
          %p349 = pneg %p251
        $region34: #{tpu_custom_call.1} parent=11 // pred_check_branch
          %351 = sbr.rel (%p349) target = $region36
        $region35: #{tpu_custom_call.1} parent=11 // pred_region
          _
        $region36: #{tpu_custom_call.1} parent=11 // pred_fallthru
          _
        // Predicated region
        $region37: #{tpu_custom_call.1} parent=11 // pred_check
          %p352 = pneg %p272
        $region38: #{tpu_custom_call.1} parent=11 // pred_check_branch
          %354 = sbr.rel (%p352) target = $region40
        $region39: #{tpu_custom_call.1} parent=11 // pred_region
          _
        $region40: #{tpu_custom_call.1} parent=11 // pred_fallthru
          _
        // Predicated region
        $region41: #{tpu_custom_call.1} parent=11 // pred_check
          %p355 = pneg %p293
        $region42: #{tpu_custom_call.1} parent=11 // pred_check_branch
          %357 = sbr.rel (%p355) target = $region44
        $region43: #{tpu_custom_call.1} parent=11 // pred_region
          _
        $region44: #{tpu_custom_call.1} parent=11 // pred_fallthru
          _
      $region12: #{tpu_custom_call.1} parent=5 // pred_fallthru
        _
      %p358 = scmp.lt.s32.totalorder %s21, 2
      // Predicated region
      $region45: #{tpu_custom_call.1} parent=5 // pred_check
        %p359 = pneg %p358
      $region46: #{tpu_custom_call.1} parent=5 // pred_check_branch
        %361 = sbr.rel (%p359) target = $region48
      $region47: #{tpu_custom_call.1} parent=5 // pred_region
        // Predicated region
        $region49: #{tpu_custom_call.1} parent=47 // pred_check
          %p362 = pneg %p41
        $region50: #{tpu_custom_call.1} parent=47 // pred_check_branch
          %364 = sbr.rel (%p362) target = $region52
        $region51: #{tpu_custom_call.1} parent=47 // pred_region
          %s365 = smul.u32 16, %s21
          %p366 = scmp.lt.s32.totalorder %s365, 31
          %s367 = scalar_select %p366, %s365, 31
          %s368 = smul.addr %s367, 8
          %s369 = scalar_lea.vmem %s0, %s368
          %s370 = smul.u32 16, %s21
        $region52: #{tpu_custom_call.1} parent=47 // pred_fallthru
          _
        // Predicated region
        $region53: #{tpu_custom_call.1} parent=47 // pred_check
          %p371 = pneg %p67
        $region54: #{tpu_custom_call.1} parent=47 // pred_check_branch
          %373 = sbr.rel (%p371) target = $region56
        $region55: #{tpu_custom_call.1} parent=47 // pred_region
          %s374 = smul.u32 16, %s21
          %p375 = scmp.lt.s32.totalorder %s374, 31
          %s376 = scalar_select %p375, %s374, 31
          %s377 = smul.addr %s376, 8
          %s378 = scalar_lea.vmem %s1, %s377
          %s379 = smul.u32 16, %s21
        $region56: #{tpu_custom_call.1} parent=47 // pred_fallthru
          _
        // Predicated region
        $region57: #{tpu_custom_call.1} parent=47 // pred_check
          %p380 = pneg %p93
        $region58: #{tpu_custom_call.1} parent=47 // pred_check_branch
          %382 = sbr.rel (%p380) target = $region60
        $region59: #{tpu_custom_call.1} parent=47 // pred_region
          %s383 = smul.u32 16, %s21
          %p384 = scmp.lt.s32.totalorder %s383, 31
          %s385 = scalar_select %p384, %s383, 31
          %s386 = smul.addr %s385, 8
          %s387 = scalar_lea.vmem %s2, %s386
          %s388 = smul.u32 16, %s21
        $region60: #{tpu_custom_call.1} parent=47 // pred_fallthru
          _
        // Predicated region
        $region61: #{tpu_custom_call.1} parent=47 // pred_check
          %p389 = pneg %p119
        $region62: #{tpu_custom_call.1} parent=47 // pred_check_branch
          %391 = sbr.rel (%p389) target = $region64
        $region63: #{tpu_custom_call.1} parent=47 // pred_region
          %s392 = smul.u32 16, %s21
          %p393 = scmp.lt.s32.totalorder %s392, 31
          %s394 = scalar_select %p393, %s392, 31
          %s395 = smul.addr %s394, 8
          %s396 = scalar_lea.vmem %s3, %s395
          %s397 = smul.u32 16, %s21
        $region64: #{tpu_custom_call.1} parent=47 // pred_fallthru
          _
      $region48: #{tpu_custom_call.1} parent=5 // pred_fallthru
        _
      %p398 = scmp.le.s32.totalorder 1, %s21
      %p399 = scmp.lt.s32.totalorder %s21, 3
      %p400 = pnand %p398, %p399
      %p401 = pneg %p400
      // Predicated region
      $region65: #{tpu_custom_call.1} parent=5 // pred_check
        _
      $region66: #{tpu_custom_call.1} parent=5 // pred_check_branch
        %403 = sbr.rel (%p400) target = $region68
      $region67: #{tpu_custom_call.1} parent=5 // pred_region
        %s404 = ssub.s32 %s21, 1
        %s405 = smul.u32 16, %s26
        %p406 = scmp.lt.s32.totalorder %s405, 31
        %s407 = scalar_select %p406, %s405, 31
        %s408 = smul.addr %s407, 8
        %s409 = scalar_lea.vmem %s0, %s408
        %p410 = pneg %p47
        %p411 = pneg %p44
        %s412 = smul.u32 16, %s26
        %p413 = scmp.lt.s32.totalorder %s412, 31
        %s414 = scalar_select %p413, %s412, 31
        %s415 = smul.addr %s414, 8
        %s416 = scalar_lea.vmem %s1, %s415
        %p417 = pneg %p73
        %p418 = pneg %p70
        %s419 = smul.u32 16, %s26
        %p420 = scmp.lt.s32.totalorder %s419, 31
        %s421 = scalar_select %p420, %s419, 31
        %s422 = smul.addr %s421, 8
        %s423 = scalar_lea.vmem %s2, %s422
        %p424 = pneg %p99
        %p425 = pneg %p96
        %s426 = smul.u32 16, %s26
        %p427 = scmp.lt.s32.totalorder %s426, 31
        %s428 = scalar_select %p427, %s426, 31
        %s429 = smul.addr %s428, 8
        %s430 = scalar_lea.vmem %s3, %s429
        %p431 = pneg %p125
        %p432 = pneg %p122
        %p433 = pneg %p146
        %p434 = pneg %p143
        %p435 = pneg %p167
        %p436 = pneg %p164
        %p437 = pneg %p188
        %p438 = pneg %p185
        %p439 = pneg %p209
        %p440 = pneg %p206
        %p441 = pneg %p230
        %p442 = pneg %p227
        %p443 = pneg %p251
        %p444 = pneg %p248
        %p445 = pneg %p272
        %p446 = pneg %p269
        %p447 = pneg %p293
        %p448 = pneg %p290
        %p449 = pneg %p319
        %p450 = pneg %p316
        %s451 = sand.u32 %s306, 1
        %s452 = scalar_lea.sflag [#allocation3], %s451
        %s453 = sand.u32 %s306, 1
        %s454 = smul.addr %s453, 128
        %s455 = scalar_lea.vmem [#allocation2], %s454
        %s456 = smul.u32 16, %s26
        %p457 = scmp.lt.s32.totalorder %s456, 31
        %s458 = scalar_select %p457, %s456, 31
        %s459 = smul.addr %s458, 8
        %s460 = scalar_lea.vmem %s0, %s459
        %s461 = smul.u32 16, %s26
        %s462 = smul.u32 16, %s26
        %p463 = scmp.lt.s32.totalorder %s462, 31
        %s464 = scalar_select %p463, %s462, 31
        %s465 = smul.addr %s464, 8
        %s466 = scalar_lea.vmem %s1, %s465
        %s467 = smul.u32 16, %s26
        %s468 = smul.u32 16, %s26
        %p469 = scmp.lt.s32.totalorder %s468, 31
        %s470 = scalar_select %p469, %s468, 31
        %s471 = smul.addr %s470, 8
        %s472 = scalar_lea.vmem %s2, %s471
        %s473 = smul.u32 16, %s26
        %s474 = smul.u32 16, %s26
        %p475 = scmp.lt.s32.totalorder %s474, 31
        %s476 = scalar_select %p475, %s474, 31
        %s477 = smul.addr %s476, 8
        %s478 = scalar_lea.vmem %s3, %s477
        %s479 = smul.u32 16, %s26
        %s480 = smul.u32 16, %s26
        %v481 = vld [vmem:[%s460] sm:$0xff]
        %v482 = vld [vmem:[%s460 + $0x8] sm:$0xff]
        %v483 = vld [vmem:[%s460 + $0x10] sm:$0xff]
        %v484 = vld [vmem:[%s460 + $0x18] sm:$0xff]
        %v485 = vld [vmem:[%s460 + $0x20] sm:$0xff]
        %v486 = vld [vmem:[%s460 + $0x28] sm:$0xff]
        %v487 = vld [vmem:[%s460 + $0x30] sm:$0xff]
        %v488 = vld [vmem:[%s460 + $0x38] sm:$0xff]
        %v489 = vld [vmem:[%s460 + $0x40] sm:$0xff]
        %v490 = vld [vmem:[%s460 + $0x48] sm:$0xff]
        %v491 = vld [vmem:[%s460 + $0x50] sm:$0xff]
        %v492 = vld [vmem:[%s460 + $0x58] sm:$0xff]
        %v493 = vld [vmem:[%s460 + $0x60] sm:$0xff]
        %v494 = vld [vmem:[%s460 + $0x68] sm:$0xff]
        %v495 = vld [vmem:[%s460 + $0x70] sm:$0xff]
        %v496 = vld [vmem:[%s460 + $0x78] sm:$0xff]
        %v497 = vld [vmem:[%s4] sm:$0x7]
        %v498 = vld [vmem:[%s466] sm:$0xff]
        %v499 = vld [vmem:[%s466 + $0x8] sm:$0xff]
        %v500 = vld [vmem:[%s466 + $0x10] sm:$0xff]
        %v501 = vld [vmem:[%s466 + $0x18] sm:$0xff]
        %v502 = vld [vmem:[%s466 + $0x20] sm:$0xff]
        %v503 = vld [vmem:[%s466 + $0x28] sm:$0xff]
        %v504 = vld [vmem:[%s466 + $0x30] sm:$0xff]
        %v505 = vld [vmem:[%s466 + $0x38] sm:$0xff]
        %v506 = vld [vmem:[%s466 + $0x40] sm:$0xff]
        %v507 = vld [vmem:[%s466 + $0x48] sm:$0xff]
        %v508 = vld [vmem:[%s466 + $0x50] sm:$0xff]
        %v509 = vld [vmem:[%s466 + $0x58] sm:$0xff]
        %v510 = vld [vmem:[%s466 + $0x60] sm:$0xff]
        %v511 = vld [vmem:[%s466 + $0x68] sm:$0xff]
        %v512 = vld [vmem:[%s466 + $0x70] sm:$0xff]
        %v513 = vld [vmem:[%s466 + $0x78] sm:$0xff]
        %v514 = vld [vmem:[%s5] sm:$0xf]
        %vm515 = vcmask 31744
        %v517 = vsel %vm515, %v498, 0
        %v520 = vsel %vm515, %v499, 0
        %v523 = vsel %vm515, %v500, 0
        %v526 = vsel %vm515, %v501, 0
        %v529 = vsel %vm515, %v502, 0
        %v532 = vsel %vm515, %v503, 0
        %v535 = vsel %vm515, %v504, 0
        %v538 = vsel %vm515, %v505, 0
        %v541 = vsel %vm515, %v506, 0
        %v544 = vsel %vm515, %v507, 0
        %v547 = vsel %vm515, %v508, 0
        %v550 = vsel %vm515, %v509, 0
        %v553 = vsel %vm515, %v510, 0
        %v556 = vsel %vm515, %v511, 0
        %v559 = vsel %vm515, %v512, 0
        %v562 = vsel %vm515, %v513, 0
        %vm564 = vcmask 1043456
        %v566 = vsel %vm564, %v514, 0
        %568 = vmatprep.subr.mxu0 0.0
        %569 = vmatpush1.msra.mxu0 %v566
        %570 = vmatprep.subr.mxu0 0.0
        %571 = vmatpush1.msra.mxu0 0.0
        %572 = vmatprep.subr.mxu0 0.0
        %573 = vmatpush1.msra.mxu0 0.0
        %574 = vmatprep.subr.mxu0 0.0
        %575 = vmatpush1.msra.mxu0 0.0
        %576 = vmatprep.subr.mxu0 0.0
        %577 = vmatpush1.msra.mxu0 0.0
        %578 = vmatprep.subr.mxu0 0.0
        %579 = vmatpush1.msra.mxu0 0.0
        %580 = vmatprep.subr.mxu0 0.0
        %581 = vmatpush1.msra.mxu0 0.0
        %582 = vmatprep.subr.mxu0 0.0
        %583 = vmatpush1.msra.mxu0 0.0
        %584 = vmatprep.subr.mxu0 0.0
        %585 = vmatpush1.msra.mxu0 0.0
        %586 = vmatprep.subr.mxu0 0.0
        %587 = vmatpush1.msra.mxu0 0.0
        %588 = vmatprep.subr.mxu0 0.0
        %589 = vmatpush1.msra.mxu0 0.0
        %590 = vmatprep.subr.mxu0 0.0
        %591 = vmatpush1.msra.mxu0 0.0
        %592 = vmatprep.subr.mxu0 0.0
        %593 = vmatpush1.msra.mxu0 0.0
        %594 = vmatprep.subr.mxu0 0.0
        %595 = vmatpush1.msra.mxu0 0.0
        %596 = vmatprep.subr.mxu0 0.0
        %597 = vmatpush1.msra.mxu0 0.0
        %598 = vmatprep.subr.mxu0 0.0
        %599 = vmatpush1.msra.mxu0 0.0
        %600 = vmatprep.subr.mxu0 0.0
        %601 = vmatpush1.msra.mxu0 0.0
        %602 = vmatprep.subr.mxu0 0.0
        %603 = vmatpush1.msra.mxu0 0.0
        %604 = vmatprep.subr.mxu0 0.0
        %605 = vmatpush1.msra.mxu0 0.0
        %606 = vmatprep.subr.mxu0 0.0
        %607 = vmatpush1.msra.mxu0 0.0
        %608 = vmatprep.subr.mxu0 0.0
        %609 = vmatpush1.msra.mxu0 0.0
        %610 = vmatprep.subr.mxu0 0.0
        %611 = vmatpush1.msra.mxu0 0.0
        %612 = vmatprep.subr.mxu0 0.0
        %613 = vmatpush1.msra.mxu0 0.0
        %614 = vmatprep.subr.mxu0 0.0
        %615 = vmatpush1.msra.mxu0 0.0
        %616 = vmatprep.subr.mxu0 0.0
        %617 = vmatpush1.msra.mxu0 0.0
        %618 = vmatprep.subr.mxu0 0.0
        %619 = vmatpush1.msra.mxu0 0.0
        %620 = vmatprep.subr.mxu0 0.0
        %621 = vmatpush1.msra.mxu0 0.0
        %622 = vmatprep.subr.mxu0 0.0
        %623 = vmatpush1.msra.mxu0 0.0
        %624 = vmatprep.subr.mxu0 0.0
        %625 = vmatpush1.msra.mxu0 0.0
        %626 = vmatprep.subr.mxu0 0.0
        %627 = vmatpush1.msra.mxu0 0.0
        %628 = vmatprep.subr.mxu0 0.0
        %629 = vmatpush1.msra.mxu0 0.0
        %630 = vmatprep.subr.mxu0 0.0
        %631 = vmatpush1.msra.mxu0 0.0
        %632 = vmatprep.mubr.f32.mxu0 0.0
        %633 = vmatmul.mubr.f32.gmra.mrb[0].mxu0 %v517
        %v634 = vpop.f32.mrb[0].mxu0
        %v635 = vadd.f32 0.0, %v634
        %v636 = vpop.f32.mrb[0].mxu0
        %637 = vmatprep.mubr.f32.mxu0 0.0
        %638 = vmatmul.mubr.f32.gmra.mrb[0].mxu0 %v520
        %v639 = vpop.f32.mrb[0].mxu0
        %v640 = vadd.f32 0.0, %v639
        %v641 = vpop.f32.mrb[0].mxu0
        %642 = vmatprep.mubr.f32.mxu0 0.0
        %643 = vmatmul.mubr.f32.gmra.mrb[0].mxu0 %v523
        %v644 = vpop.f32.mrb[0].mxu0
        %v645 = vadd.f32 0.0, %v644
        %v646 = vpop.f32.mrb[0].mxu0
        %647 = vmatprep.mubr.f32.mxu0 0.0
        %648 = vmatmul.mubr.f32.gmra.mrb[0].mxu0 %v526
        %v649 = vpop.f32.mrb[0].mxu0
        %v650 = vadd.f32 0.0, %v649
        %v651 = vpop.f32.mrb[0].mxu0
        %652 = vmatprep.mubr.f32.mxu0 0.0
        %653 = vmatmul.mubr.f32.gmra.mrb[0].mxu0 %v529
        %v654 = vpop.f32.mrb[0].mxu0
        %v655 = vadd.f32 0.0, %v654
        %v656 = vpop.f32.mrb[0].mxu0
        %657 = vmatprep.mubr.f32.mxu0 0.0
        %658 = vmatmul.mubr.f32.gmra.mrb[0].mxu0 %v532
        %v659 = vpop.f32.mrb[0].mxu0
        %v660 = vadd.f32 0.0, %v659
        %v661 = vpop.f32.mrb[0].mxu0
        %662 = vmatprep.mubr.f32.mxu0 0.0
        %663 = vmatmul.mubr.f32.gmra.mrb[0].mxu0 %v535
        %v664 = vpop.f32.mrb[0].mxu0
        %v665 = vadd.f32 0.0, %v664
        %v666 = vpop.f32.mrb[0].mxu0
        %667 = vmatprep.mubr.f32.mxu0 0.0
        %668 = vmatmul.mubr.f32.gmra.mrb[0].mxu0 %v538
        %v669 = vpop.f32.mrb[0].mxu0
        %v670 = vadd.f32 0.0, %v669
        %v671 = vpop.f32.mrb[0].mxu0
        %672 = vmatprep.mubr.f32.mxu0 0.0
        %673 = vmatmul.mubr.f32.gmra.mrb[0].mxu0 %v541
        %v674 = vpop.f32.mrb[0].mxu0
        %v675 = vadd.f32 0.0, %v674
        %v676 = vpop.f32.mrb[0].mxu0
        %677 = vmatprep.mubr.f32.mxu0 0.0
        %678 = vmatmul.mubr.f32.gmra.mrb[0].mxu0 %v544
        %v679 = vpop.f32.mrb[0].mxu0
        %v680 = vadd.f32 0.0, %v679
        %v681 = vpop.f32.mrb[0].mxu0
        %682 = vmatprep.mubr.f32.mxu0 0.0
        %683 = vmatmul.mubr.f32.gmra.mrb[0].mxu0 %v547
        %v684 = vpop.f32.mrb[0].mxu0
        %v685 = vadd.f32 0.0, %v684
        %v686 = vpop.f32.mrb[0].mxu0
        %687 = vmatprep.mubr.f32.mxu0 0.0
        %688 = vmatmul.mubr.f32.gmra.mrb[0].mxu0 %v550
        %v689 = vpop.f32.mrb[0].mxu0
        %v690 = vadd.f32 0.0, %v689
        %v691 = vpop.f32.mrb[0].mxu0
        %692 = vmatprep.mubr.f32.mxu0 0.0
        %693 = vmatmul.mubr.f32.gmra.mrb[0].mxu0 %v553
        %v694 = vpop.f32.mrb[0].mxu0
        %v695 = vadd.f32 0.0, %v694
        %v696 = vpop.f32.mrb[0].mxu0
        %697 = vmatprep.mubr.f32.mxu0 0.0
        %698 = vmatmul.mubr.f32.gmra.mrb[0].mxu0 %v556
        %v699 = vpop.f32.mrb[0].mxu0
        %v700 = vadd.f32 0.0, %v699
        %v701 = vpop.f32.mrb[0].mxu0
        %702 = vmatprep.mubr.f32.mxu0 0.0
        %703 = vmatmul.mubr.f32.gmra.mrb[0].mxu0 %v559
        %v704 = vpop.f32.mrb[0].mxu0
        %v705 = vadd.f32 0.0, %v704
        %v706 = vpop.f32.mrb[0].mxu0
        %707 = vmatprep.mubr.f32.mxu0 0.0
        %708 = vmatmul.mubr.f32.gmra.mrb[0].mxu0 %v562
        %v709 = vpop.f32.mrb[0].mxu0
        %v710 = vadd.f32 0.0, %v709
        %v711 = vpop.f32.mrb[0].mxu0
        %712 = vdwg.mxu0
        %vm713 = vcmask 23552
        %v715 = vsel %vm713, %v481, 0
        %v718 = vsel %vm713, %v482, 0
        %v721 = vsel %vm713, %v483, 0
        %v724 = vsel %vm713, %v484, 0
        %v727 = vsel %vm713, %v485, 0
        %v730 = vsel %vm713, %v486, 0
        %v733 = vsel %vm713, %v487, 0
        %v736 = vsel %vm713, %v488, 0
        %v739 = vsel %vm713, %v489, 0
        %v742 = vsel %vm713, %v490, 0
        %v745 = vsel %vm713, %v491, 0
        %v748 = vsel %vm713, %v492, 0
        %v751 = vsel %vm713, %v493, 0
        %v754 = vsel %vm713, %v494, 0
        %v757 = vsel %vm713, %v495, 0
        %v760 = vsel %vm713, %v496, 0
        %vm762 = vcmask 1042432
        %v764 = vsel %vm762, %v497, 0
        %766 = vmatprep.subr.mxu0 0.0
        %767 = vmatpush1.msra.mxu0 %v764
        %768 = vmatprep.subr.mxu0 0.0
        %769 = vmatpush1.msra.mxu0 0.0
        %770 = vmatprep.subr.mxu0 0.0
        %771 = vmatpush1.msra.mxu0 0.0
        %772 = vmatprep.subr.mxu0 0.0
        %773 = vmatpush1.msra.mxu0 0.0
        %774 = vmatprep.subr.mxu0 0.0
        %775 = vmatpush1.msra.mxu0 0.0
        %776 = vmatprep.subr.mxu0 0.0
        %777 = vmatpush1.msra.mxu0 0.0
        %778 = vmatprep.subr.mxu0 0.0
        %779 = vmatpush1.msra.mxu0 0.0
        %780 = vmatprep.subr.mxu0 0.0
        %781 = vmatpush1.msra.mxu0 0.0
        %782 = vmatprep.subr.mxu0 0.0
        %783 = vmatpush1.msra.mxu0 0.0
        %784 = vmatprep.subr.mxu0 0.0
        %785 = vmatpush1.msra.mxu0 0.0
        %786 = vmatprep.subr.mxu0 0.0
        %787 = vmatpush1.msra.mxu0 0.0
        %788 = vmatprep.subr.mxu0 0.0
        %789 = vmatpush1.msra.mxu0 0.0
        %790 = vmatprep.subr.mxu0 0.0
        %791 = vmatpush1.msra.mxu0 0.0
        %792 = vmatprep.subr.mxu0 0.0
        %793 = vmatpush1.msra.mxu0 0.0
        %794 = vmatprep.subr.mxu0 0.0
        %795 = vmatpush1.msra.mxu0 0.0
        %796 = vmatprep.subr.mxu0 0.0
        %797 = vmatpush1.msra.mxu0 0.0
        %798 = vmatprep.subr.mxu0 0.0
        %799 = vmatpush1.msra.mxu0 0.0
        %800 = vmatprep.subr.mxu0 0.0
        %801 = vmatpush1.msra.mxu0 0.0
        %802 = vmatprep.subr.mxu0 0.0
        %803 = vmatpush1.msra.mxu0 0.0
        %804 = vmatprep.subr.mxu0 0.0
        %805 = vmatpush1.msra.mxu0 0.0
        %806 = vmatprep.subr.mxu0 0.0
        %807 = vmatpush1.msra.mxu0 0.0
        %808 = vmatprep.subr.mxu0 0.0
        %809 = vmatpush1.msra.mxu0 0.0
        %810 = vmatprep.subr.mxu0 0.0
        %811 = vmatpush1.msra.mxu0 0.0
        %812 = vmatprep.subr.mxu0 0.0
        %813 = vmatpush1.msra.mxu0 0.0
        %814 = vmatprep.subr.mxu0 0.0
        %815 = vmatpush1.msra.mxu0 0.0
        %816 = vmatprep.subr.mxu0 0.0
        %817 = vmatpush1.msra.mxu0 0.0
        %818 = vmatprep.subr.mxu0 0.0
        %819 = vmatpush1.msra.mxu0 0.0
        %820 = vmatprep.subr.mxu0 0.0
        %821 = vmatpush1.msra.mxu0 0.0
        %822 = vmatprep.subr.mxu0 0.0
        %823 = vmatpush1.msra.mxu0 0.0
        %824 = vmatprep.subr.mxu0 0.0
        %825 = vmatpush1.msra.mxu0 0.0
        %826 = vmatprep.subr.mxu0 0.0
        %827 = vmatpush1.msra.mxu0 0.0
        %828 = vmatprep.subr.mxu0 0.0
        %829 = vmatpush1.msra.mxu0 0.0
        %830 = vmatprep.mubr.f32.mxu0 0.0
        %831 = vmatmul.mubr.f32.gmra.mrb[0].mxu0 %v715
        %v832 = vpop.f32.mrb[0].mxu0
        %v833 = vadd.f32 %v635, %v832
        %v834 = vpop.f32.mrb[0].mxu0
        %835 = vmatprep.mubr.f32.mxu0 0.0
        %836 = vmatmul.mubr.f32.gmra.mrb[0].mxu0 %v718
        %v837 = vpop.f32.mrb[0].mxu0
        %v838 = vadd.f32 %v640, %v837
        %v839 = vpop.f32.mrb[0].mxu0
        %840 = vmatprep.mubr.f32.mxu0 0.0
        %841 = vmatmul.mubr.f32.gmra.mrb[0].mxu0 %v721
        %v842 = vpop.f32.mrb[0].mxu0
        %v843 = vadd.f32 %v645, %v842
        %v844 = vpop.f32.mrb[0].mxu0
        %845 = vmatprep.mubr.f32.mxu0 0.0
        %846 = vmatmul.mubr.f32.gmra.mrb[0].mxu0 %v724
        %v847 = vpop.f32.mrb[0].mxu0
        %v848 = vadd.f32 %v650, %v847
        %v849 = vpop.f32.mrb[0].mxu0
        %850 = vmatprep.mubr.f32.mxu0 0.0
        %851 = vmatmul.mubr.f32.gmra.mrb[0].mxu0 %v727
        %v852 = vpop.f32.mrb[0].mxu0
        %v853 = vadd.f32 %v655, %v852
        %v854 = vpop.f32.mrb[0].mxu0
        %855 = vmatprep.mubr.f32.mxu0 0.0
        %856 = vmatmul.mubr.f32.gmra.mrb[0].mxu0 %v730
        %v857 = vpop.f32.mrb[0].mxu0
        %v858 = vadd.f32 %v660, %v857
        %v859 = vpop.f32.mrb[0].mxu0
        %860 = vmatprep.mubr.f32.mxu0 0.0
        %861 = vmatmul.mubr.f32.gmra.mrb[0].mxu0 %v733
        %v862 = vpop.f32.mrb[0].mxu0
        %v863 = vadd.f32 %v665, %v862
        %v864 = vpop.f32.mrb[0].mxu0
        %865 = vmatprep.mubr.f32.mxu0 0.0
        %866 = vmatmul.mubr.f32.gmra.mrb[0].mxu0 %v736
        %v867 = vpop.f32.mrb[0].mxu0
        %v868 = vadd.f32 %v670, %v867
        %v869 = vpop.f32.mrb[0].mxu0
        %870 = vmatprep.mubr.f32.mxu0 0.0
        %871 = vmatmul.mubr.f32.gmra.mrb[0].mxu0 %v739
        %v872 = vpop.f32.mrb[0].mxu0
        %v873 = vadd.f32 %v675, %v872
        %v874 = vpop.f32.mrb[0].mxu0
        %875 = vmatprep.mubr.f32.mxu0 0.0
        %876 = vmatmul.mubr.f32.gmra.mrb[0].mxu0 %v742
        %v877 = vpop.f32.mrb[0].mxu0
        %v878 = vadd.f32 %v680, %v877
        %v879 = vpop.f32.mrb[0].mxu0
        %880 = vmatprep.mubr.f32.mxu0 0.0
        %881 = vmatmul.mubr.f32.gmra.mrb[0].mxu0 %v745
        %v882 = vpop.f32.mrb[0].mxu0
        %v883 = vadd.f32 %v685, %v882
        %v884 = vpop.f32.mrb[0].mxu0
        %885 = vmatprep.mubr.f32.mxu0 0.0
        %886 = vmatmul.mubr.f32.gmra.mrb[0].mxu0 %v748
        %v887 = vpop.f32.mrb[0].mxu0
        %v888 = vadd.f32 %v690, %v887
        %v889 = vpop.f32.mrb[0].mxu0
        %890 = vmatprep.mubr.f32.mxu0 0.0
        %891 = vmatmul.mubr.f32.gmra.mrb[0].mxu0 %v751
        %v892 = vpop.f32.mrb[0].mxu0
        %v893 = vadd.f32 %v695, %v892
        %v894 = vpop.f32.mrb[0].mxu0
        %895 = vmatprep.mubr.f32.mxu0 0.0
        %896 = vmatmul.mubr.f32.gmra.mrb[0].mxu0 %v754
        %v897 = vpop.f32.mrb[0].mxu0
        %v898 = vadd.f32 %v700, %v897
        %v899 = vpop.f32.mrb[0].mxu0
        %900 = vmatprep.mubr.f32.mxu0 0.0
        %901 = vmatmul.mubr.f32.gmra.mrb[0].mxu0 %v757
        %v902 = vpop.f32.mrb[0].mxu0
        %v903 = vadd.f32 %v705, %v902
        %v904 = vpop.f32.mrb[0].mxu0
        %905 = vmatprep.mubr.f32.mxu0 0.0
        %906 = vmatmul.mubr.f32.gmra.mrb[0].mxu0 %v760
        %v907 = vpop.f32.mrb[0].mxu0
        %v908 = vadd.f32 %v710, %v907
        %v909 = vpop.f32.mrb[0].mxu0
        %910 = vdwg.mxu0
        %v911 = vld [vmem:[%s472] sm:$0xff]
        %v912 = vld [vmem:[%s472 + $0x8] sm:$0xff]
        %v913 = vld [vmem:[%s472 + $0x10] sm:$0xff]
        %v914 = vld [vmem:[%s472 + $0x18] sm:$0xff]
        %v915 = vld [vmem:[%s472 + $0x20] sm:$0xff]
        %v916 = vld [vmem:[%s472 + $0x28] sm:$0xff]
        %v917 = vld [vmem:[%s472 + $0x30] sm:$0xff]
        %v918 = vld [vmem:[%s472 + $0x38] sm:$0xff]
        %v919 = vld [vmem:[%s472 + $0x40] sm:$0xff]
        %v920 = vld [vmem:[%s472 + $0x48] sm:$0xff]
        %v921 = vld [vmem:[%s472 + $0x50] sm:$0xff]
        %v922 = vld [vmem:[%s472 + $0x58] sm:$0xff]
        %v923 = vld [vmem:[%s472 + $0x60] sm:$0xff]
        %v924 = vld [vmem:[%s472 + $0x68] sm:$0xff]
        %v925 = vld [vmem:[%s472 + $0x70] sm:$0xff]
        %v926 = vld [vmem:[%s472 + $0x78] sm:$0xff]
        %v927 = vld [vmem:[%s6] sm:$0xff]
        %v928 = vld [vmem:[%s6 + $0x8] sm:$0xff]
        %v929 = vld [vmem:[%s6 + $0x10] sm:$0xff]
        %vm930 = vcmask 195584
        %v932 = vsel %vm930, %v911, 0
        %v935 = vsel %vm930, %v912, 0
        %v938 = vsel %vm930, %v913, 0
        %v941 = vsel %vm930, %v914, 0
        %v944 = vsel %vm930, %v915, 0
        %v947 = vsel %vm930, %v916, 0
        %v950 = vsel %vm930, %v917, 0
        %v953 = vsel %vm930, %v918, 0
        %v956 = vsel %vm930, %v919, 0
        %v959 = vsel %vm930, %v920, 0
        %v962 = vsel %vm930, %v921, 0
        %v965 = vsel %vm930, %v922, 0
        %v968 = vsel %vm930, %v923, 0
        %v971 = vsel %vm930, %v924, 0
        %v974 = vsel %vm930, %v925, 0
        %v977 = vsel %vm930, %v926, 0
        %979 = vmatprep.subr.mxu0 0.0
        %980 = vmatpush1.msra.mxu0 %v927
        %981 = vmatprep.subr.mxu0 0.0
        %982 = vmatpush1.msra.mxu0 %v928
        %983 = vmatprep.subr.mxu0 0.0
        %984 = vmatpush1.msra.mxu0 %v929
        %985 = vmatprep.subr.mxu0 0.0
        %986 = vmatpush1.msra.mxu0 0.0
        %987 = vmatprep.subr.mxu0 0.0
        %988 = vmatpush1.msra.mxu0 0.0
        %989 = vmatprep.subr.mxu0 0.0
        %990 = vmatpush1.msra.mxu0 0.0
        %991 = vmatprep.subr.mxu0 0.0
        %992 = vmatpush1.msra.mxu0 0.0
        %993 = vmatprep.subr.mxu0 0.0
        %994 = vmatpush1.msra.mxu0 0.0
        %995 = vmatprep.subr.mxu0 0.0
        %996 = vmatpush1.msra.mxu0 0.0
        %997 = vmatprep.subr.mxu0 0.0
        %998 = vmatpush1.msra.mxu0 0.0
        %999 = vmatprep.subr.mxu0 0.0
        %1000 = vmatpush1.msra.mxu0 0.0
        %1001 = vmatprep.subr.mxu0 0.0
        %1002 = vmatpush1.msra.mxu0 0.0
        %1003 = vmatprep.subr.mxu0 0.0
        %1004 = vmatpush1.msra.mxu0 0.0
        %1005 = vmatprep.subr.mxu0 0.0
        %1006 = vmatpush1.msra.mxu0 0.0
        %1007 = vmatprep.subr.mxu0 0.0
        %1008 = vmatpush1.msra.mxu0 0.0
        %1009 = vmatprep.subr.mxu0 0.0
        %1010 = vmatpush1.msra.mxu0 0.0
        %1011 = vmatprep.subr.mxu0 0.0
        %1012 = vmatpush1.msra.mxu0 0.0
        %1013 = vmatprep.subr.mxu0 0.0
        %1014 = vmatpush1.msra.mxu0 0.0
        %1015 = vmatprep.subr.mxu0 0.0
        %1016 = vmatpush1.msra.mxu0 0.0
        %1017 = vmatprep.subr.mxu0 0.0
        %1018 = vmatpush1.msra.mxu0 0.0
        %1019 = vmatprep.subr.mxu0 0.0
        %1020 = vmatpush1.msra.mxu0 0.0
        %1021 = vmatprep.subr.mxu0 0.0
        %1022 = vmatpush1.msra.mxu0 0.0
        %1023 = vmatprep.subr.mxu0 0.0
        %1024 = vmatpush1.msra.mxu0 0.0
        %1025 = vmatprep.subr.mxu0 0.0
        %1026 = vmatpush1.msra.mxu0 0.0
        %1027 = vmatprep.subr.mxu0 0.0
        %1028 = vmatpush1.msra.mxu0 0.0
        %1029 = vmatprep.subr.mxu0 0.0
        %1030 = vmatpush1.msra.mxu0 0.0
        %1031 = vmatprep.subr.mxu0 0.0
        %1032 = vmatpush1.msra.mxu0 0.0
        %1033 = vmatprep.subr.mxu0 0.0
        %1034 = vmatpush1.msra.mxu0 0.0
        %1035 = vmatprep.subr.mxu0 0.0
        %1036 = vmatpush1.msra.mxu0 0.0
        %1037 = vmatprep.subr.mxu0 0.0
        %1038 = vmatpush1.msra.mxu0 0.0
        %1039 = vmatprep.subr.mxu0 0.0
        %1040 = vmatpush1.msra.mxu0 0.0
        %1041 = vmatprep.subr.mxu0 0.0
        %1042 = vmatpush1.msra.mxu0 0.0
        %1043 = vmatprep.mubr.f32.mxu0 0.0
        %1044 = vmatmul.mubr.f32.gmra.mrb[0].mxu0 %v932
        %v1045 = vpop.f32.mrb[0].mxu0
        %v1046 = vadd.f32 0.0, %v1045
        %v1047 = vpop.f32.mrb[0].mxu0
        %1048 = vmatprep.mubr.f32.mxu0 0.0
        %1049 = vmatmul.mubr.f32.gmra.mrb[0].mxu0 %v935
        %v1050 = vpop.f32.mrb[0].mxu0
        %v1051 = vadd.f32 0.0, %v1050
        %v1052 = vpop.f32.mrb[0].mxu0
        %1053 = vmatprep.mubr.f32.mxu0 0.0
        %1054 = vmatmul.mubr.f32.gmra.mrb[0].mxu0 %v938
        %v1055 = vpop.f32.mrb[0].mxu0
        %v1056 = vadd.f32 0.0, %v1055
        %v1057 = vpop.f32.mrb[0].mxu0
        %1058 = vmatprep.mubr.f32.mxu0 0.0
        %1059 = vmatmul.mubr.f32.gmra.mrb[0].mxu0 %v941
        %v1060 = vpop.f32.mrb[0].mxu0
        %v1061 = vadd.f32 0.0, %v1060
        %v1062 = vpop.f32.mrb[0].mxu0
        %1063 = vmatprep.mubr.f32.mxu0 0.0
        %1064 = vmatmul.mubr.f32.gmra.mrb[0].mxu0 %v944
        %v1065 = vpop.f32.mrb[0].mxu0
        %v1066 = vadd.f32 0.0, %v1065
        %v1067 = vpop.f32.mrb[0].mxu0
        %1068 = vmatprep.mubr.f32.mxu0 0.0
        %1069 = vmatmul.mubr.f32.gmra.mrb[0].mxu0 %v947
        %v1070 = vpop.f32.mrb[0].mxu0
        %v1071 = vadd.f32 0.0, %v1070
        %v1072 = vpop.f32.mrb[0].mxu0
        %1073 = vmatprep.mubr.f32.mxu0 0.0
        %1074 = vmatmul.mubr.f32.gmra.mrb[0].mxu0 %v950
        %v1075 = vpop.f32.mrb[0].mxu0
        %v1076 = vadd.f32 0.0, %v1075
        %v1077 = vpop.f32.mrb[0].mxu0
        %1078 = vmatprep.mubr.f32.mxu0 0.0
        %1079 = vmatmul.mubr.f32.gmra.mrb[0].mxu0 %v953
        %v1080 = vpop.f32.mrb[0].mxu0
        %v1081 = vadd.f32 0.0, %v1080
        %v1082 = vpop.f32.mrb[0].mxu0
        %1083 = vmatprep.mubr.f32.mxu0 0.0
        %1084 = vmatmul.mubr.f32.gmra.mrb[0].mxu0 %v956
        %v1085 = vpop.f32.mrb[0].mxu0
        %v1086 = vadd.f32 0.0, %v1085
        %v1087 = vpop.f32.mrb[0].mxu0
        %1088 = vmatprep.mubr.f32.mxu0 0.0
        %1089 = vmatmul.mubr.f32.gmra.mrb[0].mxu0 %v959
        %v1090 = vpop.f32.mrb[0].mxu0
        %v1091 = vadd.f32 0.0, %v1090
        %v1092 = vpop.f32.mrb[0].mxu0
        %1093 = vmatprep.mubr.f32.mxu0 0.0
        %1094 = vmatmul.mubr.f32.gmra.mrb[0].mxu0 %v962
        %v1095 = vpop.f32.mrb[0].mxu0
        %v1096 = vadd.f32 0.0, %v1095
        %v1097 = vpop.f32.mrb[0].mxu0
        %1098 = vmatprep.mubr.f32.mxu0 0.0
        %1099 = vmatmul.mubr.f32.gmra.mrb[0].mxu0 %v965
        %v1100 = vpop.f32.mrb[0].mxu0
        %v1101 = vadd.f32 0.0, %v1100
        %v1102 = vpop.f32.mrb[0].mxu0
        %1103 = vmatprep.mubr.f32.mxu0 0.0
        %1104 = vmatmul.mubr.f32.gmra.mrb[0].mxu0 %v968
        %v1105 = vpop.f32.mrb[0].mxu0
        %v1106 = vadd.f32 0.0, %v1105
        %v1107 = vpop.f32.mrb[0].mxu0
        %1108 = vmatprep.mubr.f32.mxu0 0.0
        %1109 = vmatmul.mubr.f32.gmra.mrb[0].mxu0 %v971
        %v1110 = vpop.f32.mrb[0].mxu0
        %v1111 = vadd.f32 0.0, %v1110
        %v1112 = vpop.f32.mrb[0].mxu0
        %1113 = vmatprep.mubr.f32.mxu0 0.0
        %1114 = vmatmul.mubr.f32.gmra.mrb[0].mxu0 %v974
        %v1115 = vpop.f32.mrb[0].mxu0
        %v1116 = vadd.f32 0.0, %v1115
        %v1117 = vpop.f32.mrb[0].mxu0
        %1118 = vmatprep.mubr.f32.mxu0 0.0
        %1119 = vmatmul.mubr.f32.gmra.mrb[0].mxu0 %v977
        %v1120 = vpop.f32.mrb[0].mxu0
        %v1121 = vadd.f32 0.0, %v1120
        %v1122 = vpop.f32.mrb[0].mxu0
        %1123 = vdwg.mxu0
        %v1124 = vadd.f32 %v833, %v1046
        %v1125 = vadd.f32 %v838, %v1051
        %v1126 = vadd.f32 %v843, %v1056
        %v1127 = vadd.f32 %v848, %v1061
        %v1128 = vadd.f32 %v853, %v1066
        %v1129 = vadd.f32 %v858, %v1071
        %v1130 = vadd.f32 %v863, %v1076
        %v1131 = vadd.f32 %v868, %v1081
        %v1132 = vadd.f32 %v873, %v1086
        %v1133 = vadd.f32 %v878, %v1091
        %v1134 = vadd.f32 %v883, %v1096
        %v1135 = vadd.f32 %v888, %v1101
        %v1136 = vadd.f32 %v893, %v1106
        %v1137 = vadd.f32 %v898, %v1111
        %v1138 = vadd.f32 %v903, %v1116
        %v1139 = vadd.f32 %v908, %v1121
        %v1140 = vld [vmem:[%s478] sm:$0xff]
        %v1141 = vld [vmem:[%s478 + $0x8] sm:$0xff]
        %v1142 = vld [vmem:[%s478 + $0x10] sm:$0xff]
        %v1143 = vld [vmem:[%s478 + $0x18] sm:$0xff]
        %v1144 = vld [vmem:[%s478 + $0x20] sm:$0xff]
        %v1145 = vld [vmem:[%s478 + $0x28] sm:$0xff]
        %v1146 = vld [vmem:[%s478 + $0x30] sm:$0xff]
        %v1147 = vld [vmem:[%s478 + $0x38] sm:$0xff]
        %v1148 = vld [vmem:[%s478 + $0x40] sm:$0xff]
        %v1149 = vld [vmem:[%s478 + $0x48] sm:$0xff]
        %v1150 = vld [vmem:[%s478 + $0x50] sm:$0xff]
        %v1151 = vld [vmem:[%s478 + $0x58] sm:$0xff]
        %v1152 = vld [vmem:[%s478 + $0x60] sm:$0xff]
        %v1153 = vld [vmem:[%s478 + $0x68] sm:$0xff]
        %v1154 = vld [vmem:[%s478 + $0x70] sm:$0xff]
        %v1155 = vld [vmem:[%s478 + $0x78] sm:$0xff]
        %v1156 = vld [vmem:[%s7] sm:$0xff]
        %v1157 = vld [vmem:[%s7 + $0x8] sm:$0xff]
        %vm1158 = vcmask 130048
        %v1160 = vsel %vm1158, %v1140, 0
        %v1163 = vsel %vm1158, %v1141, 0
        %v1166 = vsel %vm1158, %v1142, 0
        %v1169 = vsel %vm1158, %v1143, 0
        %v1172 = vsel %vm1158, %v1144, 0
        %v1175 = vsel %vm1158, %v1145, 0
        %v1178 = vsel %vm1158, %v1146, 0
        %v1181 = vsel %vm1158, %v1147, 0
        %v1184 = vsel %vm1158, %v1148, 0
        %v1187 = vsel %vm1158, %v1149, 0
        %v1190 = vsel %vm1158, %v1150, 0
        %v1193 = vsel %vm1158, %v1151, 0
        %v1196 = vsel %vm1158, %v1152, 0
        %v1199 = vsel %vm1158, %v1153, 0
        %v1202 = vsel %vm1158, %v1154, 0
        %v1205 = vsel %vm1158, %v1155, 0
        %1207 = vmatprep.subr.mxu0 0.0
        %1208 = vmatpush1.msra.mxu0 %v1156
        %1209 = vmatprep.subr.mxu0 0.0
        %1210 = vmatpush1.msra.mxu0 %v1157
        %1211 = vmatprep.subr.mxu0 0.0
        %1212 = vmatpush1.msra.mxu0 0.0
        %1213 = vmatprep.subr.mxu0 0.0
        %1214 = vmatpush1.msra.mxu0 0.0
        %1215 = vmatprep.subr.mxu0 0.0
        %1216 = vmatpush1.msra.mxu0 0.0
        %1217 = vmatprep.subr.mxu0 0.0
        %1218 = vmatpush1.msra.mxu0 0.0
        %1219 = vmatprep.subr.mxu0 0.0
        %1220 = vmatpush1.msra.mxu0 0.0
        %1221 = vmatprep.subr.mxu0 0.0
        %1222 = vmatpush1.msra.mxu0 0.0
        %1223 = vmatprep.subr.mxu0 0.0
        %1224 = vmatpush1.msra.mxu0 0.0
        %1225 = vmatprep.subr.mxu0 0.0
        %1226 = vmatpush1.msra.mxu0 0.0
        %1227 = vmatprep.subr.mxu0 0.0
        %1228 = vmatpush1.msra.mxu0 0.0
        %1229 = vmatprep.subr.mxu0 0.0
        %1230 = vmatpush1.msra.mxu0 0.0
        %1231 = vmatprep.subr.mxu0 0.0
        %1232 = vmatpush1.msra.mxu0 0.0
        %1233 = vmatprep.subr.mxu0 0.0
        %1234 = vmatpush1.msra.mxu0 0.0
        %1235 = vmatprep.subr.mxu0 0.0
        %1236 = vmatpush1.msra.mxu0 0.0
        %1237 = vmatprep.subr.mxu0 0.0
        %1238 = vmatpush1.msra.mxu0 0.0
        %1239 = vmatprep.subr.mxu0 0.0
        %1240 = vmatpush1.msra.mxu0 0.0
        %1241 = vmatprep.subr.mxu0 0.0
        %1242 = vmatpush1.msra.mxu0 0.0
        %1243 = vmatprep.subr.mxu0 0.0
        %1244 = vmatpush1.msra.mxu0 0.0
        %1245 = vmatprep.subr.mxu0 0.0
        %1246 = vmatpush1.msra.mxu0 0.0
        %1247 = vmatprep.subr.mxu0 0.0
        %1248 = vmatpush1.msra.mxu0 0.0
        %1249 = vmatprep.subr.mxu0 0.0
        %1250 = vmatpush1.msra.mxu0 0.0
        %1251 = vmatprep.subr.mxu0 0.0
        %1252 = vmatpush1.msra.mxu0 0.0
        %1253 = vmatprep.subr.mxu0 0.0
        %1254 = vmatpush1.msra.mxu0 0.0
        %1255 = vmatprep.subr.mxu0 0.0
        %1256 = vmatpush1.msra.mxu0 0.0
        %1257 = vmatprep.subr.mxu0 0.0
        %1258 = vmatpush1.msra.mxu0 0.0
        %1259 = vmatprep.subr.mxu0 0.0
        %1260 = vmatpush1.msra.mxu0 0.0
        %1261 = vmatprep.subr.mxu0 0.0
        %1262 = vmatpush1.msra.mxu0 0.0
        %1263 = vmatprep.subr.mxu0 0.0
        %1264 = vmatpush1.msra.mxu0 0.0
        %1265 = vmatprep.subr.mxu0 0.0
        %1266 = vmatpush1.msra.mxu0 0.0
        %1267 = vmatprep.subr.mxu0 0.0
        %1268 = vmatpush1.msra.mxu0 0.0
        %1269 = vmatprep.subr.mxu0 0.0
        %1270 = vmatpush1.msra.mxu0 0.0
        %1271 = vmatprep.mubr.f32.mxu0 0.0
        %1272 = vmatmul.mubr.f32.gmra.mrb[0].mxu0 %v1160
        %v1273 = vpop.f32.mrb[0].mxu0
        %v1274 = vadd.f32 0.0, %v1273
        %v1275 = vpop.f32.mrb[0].mxu0
        %1276 = vmatprep.mubr.f32.mxu0 0.0
        %1277 = vmatmul.mubr.f32.gmra.mrb[0].mxu0 %v1163
        %v1278 = vpop.f32.mrb[0].mxu0
        %v1279 = vadd.f32 0.0, %v1278
        %v1280 = vpop.f32.mrb[0].mxu0
        %1281 = vmatprep.mubr.f32.mxu0 0.0
        %1282 = vmatmul.mubr.f32.gmra.mrb[0].mxu0 %v1166
        %v1283 = vpop.f32.mrb[0].mxu0
        %v1284 = vadd.f32 0.0, %v1283
        %v1285 = vpop.f32.mrb[0].mxu0
        %1286 = vmatprep.mubr.f32.mxu0 0.0
        %1287 = vmatmul.mubr.f32.gmra.mrb[0].mxu0 %v1169
        %v1288 = vpop.f32.mrb[0].mxu0
        %v1289 = vadd.f32 0.0, %v1288
        %v1290 = vpop.f32.mrb[0].mxu0
        %1291 = vmatprep.mubr.f32.mxu0 0.0
        %1292 = vmatmul.mubr.f32.gmra.mrb[0].mxu0 %v1172
        %v1293 = vpop.f32.mrb[0].mxu0
        %v1294 = vadd.f32 0.0, %v1293
        %v1295 = vpop.f32.mrb[0].mxu0
        %1296 = vmatprep.mubr.f32.mxu0 0.0
        %1297 = vmatmul.mubr.f32.gmra.mrb[0].mxu0 %v1175
        %v1298 = vpop.f32.mrb[0].mxu0
        %v1299 = vadd.f32 0.0, %v1298
        %v1300 = vpop.f32.mrb[0].mxu0
        %1301 = vmatprep.mubr.f32.mxu0 0.0
        %1302 = vmatmul.mubr.f32.gmra.mrb[0].mxu0 %v1178
        %v1303 = vpop.f32.mrb[0].mxu0
        %v1304 = vadd.f32 0.0, %v1303
        %v1305 = vpop.f32.mrb[0].mxu0
        %1306 = vmatprep.mubr.f32.mxu0 0.0
        %1307 = vmatmul.mubr.f32.gmra.mrb[0].mxu0 %v1181
        %v1308 = vpop.f32.mrb[0].mxu0
        %v1309 = vadd.f32 0.0, %v1308
        %v1310 = vpop.f32.mrb[0].mxu0
        %1311 = vmatprep.mubr.f32.mxu0 0.0
        %1312 = vmatmul.mubr.f32.gmra.mrb[0].mxu0 %v1184
        %v1313 = vpop.f32.mrb[0].mxu0
        %v1314 = vadd.f32 0.0, %v1313
        %v1315 = vpop.f32.mrb[0].mxu0
        %1316 = vmatprep.mubr.f32.mxu0 0.0
        %1317 = vmatmul.mubr.f32.gmra.mrb[0].mxu0 %v1187
        %v1318 = vpop.f32.mrb[0].mxu0
        %v1319 = vadd.f32 0.0, %v1318
        %v1320 = vpop.f32.mrb[0].mxu0
        %1321 = vmatprep.mubr.f32.mxu0 0.0
        %1322 = vmatmul.mubr.f32.gmra.mrb[0].mxu0 %v1190
        %v1323 = vpop.f32.mrb[0].mxu0
        %v1324 = vadd.f32 0.0, %v1323
        %v1325 = vpop.f32.mrb[0].mxu0
        %1326 = vmatprep.mubr.f32.mxu0 0.0
        %1327 = vmatmul.mubr.f32.gmra.mrb[0].mxu0 %v1193
        %v1328 = vpop.f32.mrb[0].mxu0
        %v1329 = vadd.f32 0.0, %v1328
        %v1330 = vpop.f32.mrb[0].mxu0
        %1331 = vmatprep.mubr.f32.mxu0 0.0
        %1332 = vmatmul.mubr.f32.gmra.mrb[0].mxu0 %v1196
        %v1333 = vpop.f32.mrb[0].mxu0
        %v1334 = vadd.f32 0.0, %v1333
        %v1335 = vpop.f32.mrb[0].mxu0
        %1336 = vmatprep.mubr.f32.mxu0 0.0
        %1337 = vmatmul.mubr.f32.gmra.mrb[0].mxu0 %v1199
        %v1338 = vpop.f32.mrb[0].mxu0
        %v1339 = vadd.f32 0.0, %v1338
        %v1340 = vpop.f32.mrb[0].mxu0
        %1341 = vmatprep.mubr.f32.mxu0 0.0
        %1342 = vmatmul.mubr.f32.gmra.mrb[0].mxu0 %v1202
        %v1343 = vpop.f32.mrb[0].mxu0
        %v1344 = vadd.f32 0.0, %v1343
        %v1345 = vpop.f32.mrb[0].mxu0
        %1346 = vmatprep.mubr.f32.mxu0 0.0
        %1347 = vmatmul.mubr.f32.gmra.mrb[0].mxu0 %v1205
        %v1348 = vpop.f32.mrb[0].mxu0
        %v1349 = vadd.f32 0.0, %v1348
        %v1350 = vpop.f32.mrb[0].mxu0
        %1351 = vdwg.mxu0
        %v1352 = vadd.f32 %v1124, %v1274
        %v1353 = vadd.f32 %v1125, %v1279
        %v1354 = vadd.f32 %v1126, %v1284
        %v1355 = vadd.f32 %v1127, %v1289
        %v1356 = vadd.f32 %v1128, %v1294
        %v1357 = vadd.f32 %v1129, %v1299
        %v1358 = vadd.f32 %v1130, %v1304
        %v1359 = vadd.f32 %v1131, %v1309
        %v1360 = vadd.f32 %v1132, %v1314
        %v1361 = vadd.f32 %v1133, %v1319
        %v1362 = vadd.f32 %v1134, %v1324
        %v1363 = vadd.f32 %v1135, %v1329
        %v1364 = vadd.f32 %v1136, %v1334
        %v1365 = vadd.f32 %v1137, %v1339
        %v1366 = vadd.f32 %v1138, %v1344
        %v1367 = vadd.f32 %v1139, %v1349
        %v1368 = vld [vmem:[%s8] sm:$0x1]
        %v1370 = vlaneseq
        %v1371 = vshrl.u32 %v1370, 7
        %v1372 = vsub.s32 0, %v1371
        %v1373 = vrot.slane %v1368, %v1372
        %v1375 = vadd.f32 %v1352, %v1373
        %v1376 = vadd.f32 %v1353, %v1373
        %v1377 = vadd.f32 %v1354, %v1373
        %v1378 = vadd.f32 %v1355, %v1373
        %v1379 = vadd.f32 %v1356, %v1373
        %v1380 = vadd.f32 %v1357, %v1373
        %v1381 = vadd.f32 %v1358, %v1373
        %v1382 = vadd.f32 %v1359, %v1373
        %v1383 = vadd.f32 %v1360, %v1373
        %v1384 = vadd.f32 %v1361, %v1373
        %v1385 = vadd.f32 %v1362, %v1373
        %v1386 = vadd.f32 %v1363, %v1373
        %v1387 = vadd.f32 %v1364, %v1373
        %v1388 = vadd.f32 %v1365, %v1373
        %v1389 = vadd.f32 %v1366, %v1373
        %v1390 = vadd.f32 %v1367, %v1373
        %v1391 = vmax.f32 %v1375, 0.0
        %v1392 = vmax.f32 %v1376, 0.0
        %v1393 = vmax.f32 %v1377, 0.0
        %v1394 = vmax.f32 %v1378, 0.0
        %v1395 = vmax.f32 %v1379, 0.0
        %v1396 = vmax.f32 %v1380, 0.0
        %v1397 = vmax.f32 %v1381, 0.0
        %v1398 = vmax.f32 %v1382, 0.0
        %v1399 = vmax.f32 %v1383, 0.0
        %v1400 = vmax.f32 %v1384, 0.0
        %v1401 = vmax.f32 %v1385, 0.0
        %v1402 = vmax.f32 %v1386, 0.0
        %v1403 = vmax.f32 %v1387, 0.0
        %v1404 = vmax.f32 %v1388, 0.0
        %v1405 = vmax.f32 %v1389, 0.0
        %v1406 = vmax.f32 %v1390, 0.0
        %v1407 = vld [vmem:[%s9] sm:$0xff]
        %v1408 = vld [vmem:[%s9 + $0x8] sm:$0xff]
        %v1409 = vld [vmem:[%s9 + $0x10] sm:$0xff]
        %v1410 = vld [vmem:[%s9 + $0x18] sm:$0xff]
        %v1411 = vld [vmem:[%s10] sm:$0x1]
        %v1413 = vlaneseq
        %v1414 = vshrl.u32 %v1413, 7
        %v1415 = vsub.s32 0, %v1414
        %v1416 = vrot.slane %v1411, %v1415
        %vm1418 = vcmask 261120
        %v1420 = vsel %vm1418, %v1391, 0
        %v1423 = vsel %vm1418, %v1392, 0
        %v1426 = vsel %vm1418, %v1393, 0
        %v1429 = vsel %vm1418, %v1394, 0
        %v1432 = vsel %vm1418, %v1395, 0
        %v1435 = vsel %vm1418, %v1396, 0
        %v1438 = vsel %vm1418, %v1397, 0
        %v1441 = vsel %vm1418, %v1398, 0
        %v1444 = vsel %vm1418, %v1399, 0
        %v1447 = vsel %vm1418, %v1400, 0
        %v1450 = vsel %vm1418, %v1401, 0
        %v1453 = vsel %vm1418, %v1402, 0
        %v1456 = vsel %vm1418, %v1403, 0
        %v1459 = vsel %vm1418, %v1404, 0
        %v1462 = vsel %vm1418, %v1405, 0
        %v1465 = vsel %vm1418, %v1406, 0
        %1467 = vmatprep.subr.mxu0 0.0
        %1468 = vmatpush1.msra.mxu0 %v1407
        %1469 = vmatprep.subr.mxu0 0.0
        %1470 = vmatpush1.msra.mxu0 %v1408
        %1471 = vmatprep.subr.mxu0 0.0
        %1472 = vmatpush1.msra.mxu0 %v1409
        %1473 = vmatprep.subr.mxu0 0.0
        %1474 = vmatpush1.msra.mxu0 %v1410
        %1475 = vmatprep.subr.mxu0 0.0
        %1476 = vmatpush1.msra.mxu0 0.0
        %1477 = vmatprep.subr.mxu0 0.0
        %1478 = vmatpush1.msra.mxu0 0.0
        %1479 = vmatprep.subr.mxu0 0.0
        %1480 = vmatpush1.msra.mxu0 0.0
        %1481 = vmatprep.subr.mxu0 0.0
        %1482 = vmatpush1.msra.mxu0 0.0
        %1483 = vmatprep.subr.mxu0 0.0
        %1484 = vmatpush1.msra.mxu0 0.0
        %1485 = vmatprep.subr.mxu0 0.0
        %1486 = vmatpush1.msra.mxu0 0.0
        %1487 = vmatprep.subr.mxu0 0.0
        %1488 = vmatpush1.msra.mxu0 0.0
        %1489 = vmatprep.subr.mxu0 0.0
        %1490 = vmatpush1.msra.mxu0 0.0
        %1491 = vmatprep.subr.mxu0 0.0
        %1492 = vmatpush1.msra.mxu0 0.0
        %1493 = vmatprep.subr.mxu0 0.0
        %1494 = vmatpush1.msra.mxu0 0.0
        %1495 = vmatprep.subr.mxu0 0.0
        %1496 = vmatpush1.msra.mxu0 0.0
        %1497 = vmatprep.subr.mxu0 0.0
        %1498 = vmatpush1.msra.mxu0 0.0
        %1499 = vmatprep.subr.mxu0 0.0
        %1500 = vmatpush1.msra.mxu0 0.0
        %1501 = vmatprep.subr.mxu0 0.0
        %1502 = vmatpush1.msra.mxu0 0.0
        %1503 = vmatprep.subr.mxu0 0.0
        %1504 = vmatpush1.msra.mxu0 0.0
        %1505 = vmatprep.subr.mxu0 0.0
        %1506 = vmatpush1.msra.mxu0 0.0
        %1507 = vmatprep.subr.mxu0 0.0
        %1508 = vmatpush1.msra.mxu0 0.0
        %1509 = vmatprep.subr.mxu0 0.0
        %1510 = vmatpush1.msra.mxu0 0.0
        %1511 = vmatprep.subr.mxu0 0.0
        %1512 = vmatpush1.msra.mxu0 0.0
        %1513 = vmatprep.subr.mxu0 0.0
        %1514 = vmatpush1.msra.mxu0 0.0
        %1515 = vmatprep.subr.mxu0 0.0
        %1516 = vmatpush1.msra.mxu0 0.0
        %1517 = vmatprep.subr.mxu0 0.0
        %1518 = vmatpush1.msra.mxu0 0.0
        %1519 = vmatprep.subr.mxu0 0.0
        %1520 = vmatpush1.msra.mxu0 0.0
        %1521 = vmatprep.subr.mxu0 0.0
        %1522 = vmatpush1.msra.mxu0 0.0
        %1523 = vmatprep.subr.mxu0 0.0
        %1524 = vmatpush1.msra.mxu0 0.0
        %1525 = vmatprep.subr.mxu0 0.0
        %1526 = vmatpush1.msra.mxu0 0.0
        %1527 = vmatprep.subr.mxu0 0.0
        %1528 = vmatpush1.msra.mxu0 0.0
        %1529 = vmatprep.subr.mxu0 0.0
        %1530 = vmatpush1.msra.mxu0 0.0
        %1531 = vmatprep.mubr.f32.mxu0 0.0
        %1532 = vmatmul.mubr.f32.gmra.mrb[0].mxu0 %v1420
        %v1533 = vpop.f32.mrb[0].mxu0
        %v1534 = vadd.f32 %v1416, %v1533
        %v1535 = vpop.f32.mrb[0].mxu0
        %1536 = vmatprep.mubr.f32.mxu0 0.0
        %1537 = vmatmul.mubr.f32.gmra.mrb[0].mxu0 %v1423
        %v1538 = vpop.f32.mrb[0].mxu0
        %v1539 = vadd.f32 %v1416, %v1538
        %v1540 = vpop.f32.mrb[0].mxu0
        %1541 = vmatprep.mubr.f32.mxu0 0.0
        %1542 = vmatmul.mubr.f32.gmra.mrb[0].mxu0 %v1426
        %v1543 = vpop.f32.mrb[0].mxu0
        %v1544 = vadd.f32 %v1416, %v1543
        %v1545 = vpop.f32.mrb[0].mxu0
        %1546 = vmatprep.mubr.f32.mxu0 0.0
        %1547 = vmatmul.mubr.f32.gmra.mrb[0].mxu0 %v1429
        %v1548 = vpop.f32.mrb[0].mxu0
        %v1549 = vadd.f32 %v1416, %v1548
        %v1550 = vpop.f32.mrb[0].mxu0
        %1551 = vmatprep.mubr.f32.mxu0 0.0
        %1552 = vmatmul.mubr.f32.gmra.mrb[0].mxu0 %v1432
        %v1553 = vpop.f32.mrb[0].mxu0
        %v1554 = vadd.f32 %v1416, %v1553
        %v1555 = vpop.f32.mrb[0].mxu0
        %1556 = vmatprep.mubr.f32.mxu0 0.0
        %1557 = vmatmul.mubr.f32.gmra.mrb[0].mxu0 %v1435
        %v1558 = vpop.f32.mrb[0].mxu0
        %v1559 = vadd.f32 %v1416, %v1558
        %v1560 = vpop.f32.mrb[0].mxu0
        %1561 = vmatprep.mubr.f32.mxu0 0.0
        %1562 = vmatmul.mubr.f32.gmra.mrb[0].mxu0 %v1438
        %v1563 = vpop.f32.mrb[0].mxu0
        %v1564 = vadd.f32 %v1416, %v1563
        %v1565 = vpop.f32.mrb[0].mxu0
        %1566 = vmatprep.mubr.f32.mxu0 0.0
        %1567 = vmatmul.mubr.f32.gmra.mrb[0].mxu0 %v1441
        %v1568 = vpop.f32.mrb[0].mxu0
        %v1569 = vadd.f32 %v1416, %v1568
        %v1570 = vpop.f32.mrb[0].mxu0
        %1571 = vmatprep.mubr.f32.mxu0 0.0
        %1572 = vmatmul.mubr.f32.gmra.mrb[0].mxu0 %v1444
        %v1573 = vpop.f32.mrb[0].mxu0
        %v1574 = vadd.f32 %v1416, %v1573
        %v1575 = vpop.f32.mrb[0].mxu0
        %1576 = vmatprep.mubr.f32.mxu0 0.0
        %1577 = vmatmul.mubr.f32.gmra.mrb[0].mxu0 %v1447
        %v1578 = vpop.f32.mrb[0].mxu0
        %v1579 = vadd.f32 %v1416, %v1578
        %v1580 = vpop.f32.mrb[0].mxu0
        %1581 = vmatprep.mubr.f32.mxu0 0.0
        %1582 = vmatmul.mubr.f32.gmra.mrb[0].mxu0 %v1450
        %v1583 = vpop.f32.mrb[0].mxu0
        %v1584 = vadd.f32 %v1416, %v1583
        %v1585 = vpop.f32.mrb[0].mxu0
        %1586 = vmatprep.mubr.f32.mxu0 0.0
        %1587 = vmatmul.mubr.f32.gmra.mrb[0].mxu0 %v1453
        %v1588 = vpop.f32.mrb[0].mxu0
        %v1589 = vadd.f32 %v1416, %v1588
        %v1590 = vpop.f32.mrb[0].mxu0
        %1591 = vmatprep.mubr.f32.mxu0 0.0
        %1592 = vmatmul.mubr.f32.gmra.mrb[0].mxu0 %v1456
        %v1593 = vpop.f32.mrb[0].mxu0
        %v1594 = vadd.f32 %v1416, %v1593
        %v1595 = vpop.f32.mrb[0].mxu0
        %1596 = vmatprep.mubr.f32.mxu0 0.0
        %1597 = vmatmul.mubr.f32.gmra.mrb[0].mxu0 %v1459
        %v1598 = vpop.f32.mrb[0].mxu0
        %v1599 = vadd.f32 %v1416, %v1598
        %v1600 = vpop.f32.mrb[0].mxu0
        %1601 = vmatprep.mubr.f32.mxu0 0.0
        %1602 = vmatmul.mubr.f32.gmra.mrb[0].mxu0 %v1462
        %v1603 = vpop.f32.mrb[0].mxu0
        %v1604 = vadd.f32 %v1416, %v1603
        %v1605 = vpop.f32.mrb[0].mxu0
        %1606 = vmatprep.mubr.f32.mxu0 0.0
        %1607 = vmatmul.mubr.f32.gmra.mrb[0].mxu0 %v1465
        %v1608 = vpop.f32.mrb[0].mxu0
        %v1609 = vadd.f32 %v1416, %v1608
        %v1610 = vpop.f32.mrb[0].mxu0
        %1611 = vdwg.mxu0
        %v1612 = vmax.f32 %v1534, 0.0
        %v1613 = vmax.f32 %v1539, 0.0
        %v1614 = vmax.f32 %v1544, 0.0
        %v1615 = vmax.f32 %v1549, 0.0
        %v1616 = vmax.f32 %v1554, 0.0
        %v1617 = vmax.f32 %v1559, 0.0
        %v1618 = vmax.f32 %v1564, 0.0
        %v1619 = vmax.f32 %v1569, 0.0
        %v1620 = vmax.f32 %v1574, 0.0
        %v1621 = vmax.f32 %v1579, 0.0
        %v1622 = vmax.f32 %v1584, 0.0
        %v1623 = vmax.f32 %v1589, 0.0
        %v1624 = vmax.f32 %v1594, 0.0
        %v1625 = vmax.f32 %v1599, 0.0
        %v1626 = vmax.f32 %v1604, 0.0
        %v1627 = vmax.f32 %v1609, 0.0
        %v1628 = vld [vmem:[%s11] sm:$0xff]
        %v1629 = vld [vmem:[%s11 + $0x8] sm:$0xff]
        %v1630 = vld [vmem:[%s11 + $0x10] sm:$0xff]
        %v1631 = vld [vmem:[%s11 + $0x18] sm:$0xff]
        %v1633 = vsel %vm1418, %v1612, 0
        %v1636 = vsel %vm1418, %v1613, 0
        %v1639 = vsel %vm1418, %v1614, 0
        %v1642 = vsel %vm1418, %v1615, 0
        %v1645 = vsel %vm1418, %v1616, 0
        %v1648 = vsel %vm1418, %v1617, 0
        %v1651 = vsel %vm1418, %v1618, 0
        %v1654 = vsel %vm1418, %v1619, 0
        %v1657 = vsel %vm1418, %v1620, 0
        %v1660 = vsel %vm1418, %v1621, 0
        %v1663 = vsel %vm1418, %v1622, 0
        %v1666 = vsel %vm1418, %v1623, 0
        %v1669 = vsel %vm1418, %v1624, 0
        %v1672 = vsel %vm1418, %v1625, 0
        %v1675 = vsel %vm1418, %v1626, 0
        %v1678 = vsel %vm1418, %v1627, 0
        %1680 = vmatprep.subr.mxu0 0.0
        %1681 = vmatpush1.msra.mxu0 %v1628
        %1682 = vmatprep.subr.mxu0 0.0
        %1683 = vmatpush1.msra.mxu0 %v1629
        %1684 = vmatprep.subr.mxu0 0.0
        %1685 = vmatpush1.msra.mxu0 %v1630
        %1686 = vmatprep.subr.mxu0 0.0
        %1687 = vmatpush1.msra.mxu0 %v1631
        %1688 = vmatprep.subr.mxu0 0.0
        %1689 = vmatpush1.msra.mxu0 0.0
        %1690 = vmatprep.subr.mxu0 0.0
        %1691 = vmatpush1.msra.mxu0 0.0
        %1692 = vmatprep.subr.mxu0 0.0
        %1693 = vmatpush1.msra.mxu0 0.0
        %1694 = vmatprep.subr.mxu0 0.0
        %1695 = vmatpush1.msra.mxu0 0.0
        %1696 = vmatprep.subr.mxu0 0.0
        %1697 = vmatpush1.msra.mxu0 0.0
        %1698 = vmatprep.subr.mxu0 0.0
        %1699 = vmatpush1.msra.mxu0 0.0
        %1700 = vmatprep.subr.mxu0 0.0
        %1701 = vmatpush1.msra.mxu0 0.0
        %1702 = vmatprep.subr.mxu0 0.0
        %1703 = vmatpush1.msra.mxu0 0.0
        %1704 = vmatprep.subr.mxu0 0.0
        %1705 = vmatpush1.msra.mxu0 0.0
        %1706 = vmatprep.subr.mxu0 0.0
        %1707 = vmatpush1.msra.mxu0 0.0
        %1708 = vmatprep.subr.mxu0 0.0
        %1709 = vmatpush1.msra.mxu0 0.0
        %1710 = vmatprep.subr.mxu0 0.0
        %1711 = vmatpush1.msra.mxu0 0.0
        %1712 = vmatprep.subr.mxu0 0.0
        %1713 = vmatpush1.msra.mxu0 0.0
        %1714 = vmatprep.subr.mxu0 0.0
        %1715 = vmatpush1.msra.mxu0 0.0
        %1716 = vmatprep.subr.mxu0 0.0
        %1717 = vmatpush1.msra.mxu0 0.0
        %1718 = vmatprep.subr.mxu0 0.0
        %1719 = vmatpush1.msra.mxu0 0.0
        %1720 = vmatprep.subr.mxu0 0.0
        %1721 = vmatpush1.msra.mxu0 0.0
        %1722 = vmatprep.subr.mxu0 0.0
        %1723 = vmatpush1.msra.mxu0 0.0
        %1724 = vmatprep.subr.mxu0 0.0
        %1725 = vmatpush1.msra.mxu0 0.0
        %1726 = vmatprep.subr.mxu0 0.0
        %1727 = vmatpush1.msra.mxu0 0.0
        %1728 = vmatprep.subr.mxu0 0.0
        %1729 = vmatpush1.msra.mxu0 0.0
        %1730 = vmatprep.subr.mxu0 0.0
        %1731 = vmatpush1.msra.mxu0 0.0
        %1732 = vmatprep.subr.mxu0 0.0
        %1733 = vmatpush1.msra.mxu0 0.0
        %1734 = vmatprep.subr.mxu0 0.0
        %1735 = vmatpush1.msra.mxu0 0.0
        %1736 = vmatprep.subr.mxu0 0.0
        %1737 = vmatpush1.msra.mxu0 0.0
        %1738 = vmatprep.subr.mxu0 0.0
        %1739 = vmatpush1.msra.mxu0 0.0
        %1740 = vmatprep.subr.mxu0 0.0
        %1741 = vmatpush1.msra.mxu0 0.0
        %1742 = vmatprep.subr.mxu0 0.0
        %1743 = vmatpush1.msra.mxu0 0.0
        %1744 = vmatprep.mubr.f32.mxu0 0.0
        %1745 = vmatmul.mubr.f32.gmra.mrb[0].mxu0 %v1633
        %v1746 = vpop.f32.mrb[0].mxu0
        %v1747 = vadd.f32 0.0, %v1746
        %v1748 = vpop.f32.mrb[0].mxu0
        %1749 = vmatprep.mubr.f32.mxu0 0.0
        %1750 = vmatmul.mubr.f32.gmra.mrb[0].mxu0 %v1636
        %v1751 = vpop.f32.mrb[0].mxu0
        %v1752 = vadd.f32 0.0, %v1751
        %v1753 = vpop.f32.mrb[0].mxu0
        %1754 = vmatprep.mubr.f32.mxu0 0.0
        %1755 = vmatmul.mubr.f32.gmra.mrb[0].mxu0 %v1639
        %v1756 = vpop.f32.mrb[0].mxu0
        %v1757 = vadd.f32 0.0, %v1756
        %v1758 = vpop.f32.mrb[0].mxu0
        %1759 = vmatprep.mubr.f32.mxu0 0.0
        %1760 = vmatmul.mubr.f32.gmra.mrb[0].mxu0 %v1642
        %v1761 = vpop.f32.mrb[0].mxu0
        %v1762 = vadd.f32 0.0, %v1761
        %v1763 = vpop.f32.mrb[0].mxu0
        %1764 = vmatprep.mubr.f32.mxu0 0.0
        %1765 = vmatmul.mubr.f32.gmra.mrb[0].mxu0 %v1645
        %v1766 = vpop.f32.mrb[0].mxu0
        %v1767 = vadd.f32 0.0, %v1766
        %v1768 = vpop.f32.mrb[0].mxu0
        %1769 = vmatprep.mubr.f32.mxu0 0.0
        %1770 = vmatmul.mubr.f32.gmra.mrb[0].mxu0 %v1648
        %v1771 = vpop.f32.mrb[0].mxu0
        %v1772 = vadd.f32 0.0, %v1771
        %v1773 = vpop.f32.mrb[0].mxu0
        %1774 = vmatprep.mubr.f32.mxu0 0.0
        %1775 = vmatmul.mubr.f32.gmra.mrb[0].mxu0 %v1651
        %v1776 = vpop.f32.mrb[0].mxu0
        %v1777 = vadd.f32 0.0, %v1776
        %v1778 = vpop.f32.mrb[0].mxu0
        %1779 = vmatprep.mubr.f32.mxu0 0.0
        %1780 = vmatmul.mubr.f32.gmra.mrb[0].mxu0 %v1654
        %v1781 = vpop.f32.mrb[0].mxu0
        %v1782 = vadd.f32 0.0, %v1781
        %v1783 = vpop.f32.mrb[0].mxu0
        %1784 = vmatprep.mubr.f32.mxu0 0.0
        %1785 = vmatmul.mubr.f32.gmra.mrb[0].mxu0 %v1657
        %v1786 = vpop.f32.mrb[0].mxu0
        %v1787 = vadd.f32 0.0, %v1786
        %v1788 = vpop.f32.mrb[0].mxu0
        %1789 = vmatprep.mubr.f32.mxu0 0.0
        %1790 = vmatmul.mubr.f32.gmra.mrb[0].mxu0 %v1660
        %v1791 = vpop.f32.mrb[0].mxu0
        %v1792 = vadd.f32 0.0, %v1791
        %v1793 = vpop.f32.mrb[0].mxu0
        %1794 = vmatprep.mubr.f32.mxu0 0.0
        %1795 = vmatmul.mubr.f32.gmra.mrb[0].mxu0 %v1663
        %v1796 = vpop.f32.mrb[0].mxu0
        %v1797 = vadd.f32 0.0, %v1796
        %v1798 = vpop.f32.mrb[0].mxu0
        %1799 = vmatprep.mubr.f32.mxu0 0.0
        %1800 = vmatmul.mubr.f32.gmra.mrb[0].mxu0 %v1666
        %v1801 = vpop.f32.mrb[0].mxu0
        %v1802 = vadd.f32 0.0, %v1801
        %v1803 = vpop.f32.mrb[0].mxu0
        %1804 = vmatprep.mubr.f32.mxu0 0.0
        %1805 = vmatmul.mubr.f32.gmra.mrb[0].mxu0 %v1669
        %v1806 = vpop.f32.mrb[0].mxu0
        %v1807 = vadd.f32 0.0, %v1806
        %v1808 = vpop.f32.mrb[0].mxu0
        %1809 = vmatprep.mubr.f32.mxu0 0.0
        %1810 = vmatmul.mubr.f32.gmra.mrb[0].mxu0 %v1672
        %v1811 = vpop.f32.mrb[0].mxu0
        %v1812 = vadd.f32 0.0, %v1811
        %v1813 = vpop.f32.mrb[0].mxu0
        %1814 = vmatprep.mubr.f32.mxu0 0.0
        %1815 = vmatmul.mubr.f32.gmra.mrb[0].mxu0 %v1675
        %v1816 = vpop.f32.mrb[0].mxu0
        %v1817 = vadd.f32 0.0, %v1816
        %v1818 = vpop.f32.mrb[0].mxu0
        %1819 = vmatprep.mubr.f32.mxu0 0.0
        %1820 = vmatmul.mubr.f32.gmra.mrb[0].mxu0 %v1678
        %v1821 = vpop.f32.mrb[0].mxu0
        %v1822 = vadd.f32 0.0, %v1821
        %v1823 = vpop.f32.mrb[0].mxu0
        %1824 = vdwg.mxu0
        %1825 = vst [vmem:[%s455] sm:$0xff] %v1747
        %1826 = vst [vmem:[%s455 + $0x8] sm:$0xff] %v1752
        %1827 = vst [vmem:[%s455 + $0x10] sm:$0xff] %v1757
        %1828 = vst [vmem:[%s455 + $0x18] sm:$0xff] %v1762
        %1829 = vst [vmem:[%s455 + $0x20] sm:$0xff] %v1767
        %1830 = vst [vmem:[%s455 + $0x28] sm:$0xff] %v1772
        %1831 = vst [vmem:[%s455 + $0x30] sm:$0xff] %v1777
        %1832 = vst [vmem:[%s455 + $0x38] sm:$0xff] %v1782
        %1833 = vst [vmem:[%s455 + $0x40] sm:$0xff] %v1787
        %1834 = vst [vmem:[%s455 + $0x48] sm:$0xff] %v1792
        %1835 = vst [vmem:[%s455 + $0x50] sm:$0xff] %v1797
        %1836 = vst [vmem:[%s455 + $0x58] sm:$0xff] %v1802
        %1837 = vst [vmem:[%s455 + $0x60] sm:$0xff] %v1807
        %1838 = vst [vmem:[%s455 + $0x68] sm:$0xff] %v1812
        %1839 = vst [vmem:[%s455 + $0x70] sm:$0xff] %v1817
        %1840 = vst [vmem:[%s455 + $0x78] sm:$0xff] %v1822
        %s1841 = sand.u32 %s306, 1
        %s1842 = scalar_lea.sflag [#allocation3], %s1841
        %s1843 = sand.u32 %s306, 1
        %s1844 = smul.addr %s1843, 128
        %s1845 = scalar_lea.vmem [#allocation2], %s1844
        // Predicated region
        $region69: #{tpu_custom_call.1} parent=67 // pred_check
          %p1846 = pneg %p316
        $region70: #{tpu_custom_call.1} parent=67 // pred_check_branch
          %1848 = sbr.rel (%p1846) target = $region72
        $region71: #{tpu_custom_call.1} parent=67 // pred_region
          %s1849 = smul.u32 16, %s26
          %s1851 = ssub.s32 2048, 2048
          %1852 = vsyncadd %s1842, %s1851
          %s1853 = smul.addr %s1849, 128
          %s1854 = scalar_lea.hbm %s12, %s1853
          %s1855 = sshll.u32 %s1845, 4
          %s1856 = int_to_ptr.vmem [resolvable:$true] %s1855
          %1861 = dma.vmem_to_hbm [thread:$0]  %s1856, 2048, %s1854, %s1842, 128, 128, 8
        $region72: #{tpu_custom_call.1} parent=67 // pred_fallthru
          _
      $region68: #{tpu_custom_call.1} parent=5 // pred_fallthru
        _
      %p1862 = scmp.le.s32.totalorder 2, %s21
      // Predicated region
      $region73: #{tpu_custom_call.1} parent=5 // pred_check
        %p1863 = pneg %p1862
      $region74: #{tpu_custom_call.1} parent=5 // pred_check_branch
        %1865 = sbr.rel (%p1863) target = $region76
      $region75: #{tpu_custom_call.1} parent=5 // pred_region
        %s1866 = ssub.s32 %s21, 2
        // Predicated region
        $region77: #{tpu_custom_call.1} parent=75 // pred_check
          %p1867 = pneg %p322
        $region78: #{tpu_custom_call.1} parent=75 // pred_check_branch
          %1869 = sbr.rel (%p1867) target = $region80
        $region79: #{tpu_custom_call.1} parent=75 // pred_region
          %s1870 = sand.u32 %s307, 1
          %s1871 = scalar_lea.sflag [#allocation3], %s1870
          %s1872 = sand.u32 %s307, 1
          %s1873 = smul.addr %s1872, 128
          %s1874 = scalar_lea.vmem [#allocation2], %s1873
          %1875 = dma.done %s1871, 2048
        $region80: #{tpu_custom_call.1} parent=75 // pred_fallthru
          _
      $region76: #{tpu_custom_call.1} parent=5 // pred_fallthru
        _
    $region6: #{tpu_custom_call.1} parent=1 // loop_footer
      %s25 = sadd.s32 1, %s21
    $region7: #{tpu_custom_call.1} parent=1 // loop_footer_branch
      %20 = sbr.rel target = $region3
    $region8: #{tpu_custom_call.1} parent=1 // loop_exit
      _
    %1876 = vsyncpa [#allocation3], 1
    %s1877 = scalar_lea.sflag [#allocation3], 1
    %1878 = vsyncpa %s1877, 1

</llo_original>
